<compile_context>
chip_gen: v7x
topology: tpu7x:2x2x1
jax: 0.10.0
libtpu: 0.0.40
codegen_flags: <defaults>
</compile_context>

<pallas_src>
import math

import jax
import jax.numpy as jnp
import numpy as np
from jax.experimental import pallas as pl
from jax.experimental.pallas import tpu as pltpu

# Scaled-down model hyper-parameters (d_model % num_heads == 0 required).
HIDDEN_SIZE = 64    # "hidden_size" of the generative model features
MLP_HIDDEN = 32     # mlp_hidden_dim
NUM_BLOCKS = 2      # mlp_num_blocks
NUM_HEADS = 8       # nn.MultiheadAttention(num_heads=8)
LN_EPS = 1e-5


def _layer_norm(x, gamma, beta, eps=LN_EPS):
    mean = jnp.mean(x, axis=-1, keepdims=True)
    var = jnp.mean(jnp.square(x - mean), axis=-1, keepdims=True)
    return (x - mean) * jax.lax.rsqrt(var + eps) * gamma + beta


def _mask_gen_kernel(scalars_ref, x_ref, w_in_ref, w_qkv_ref, w_of_ref,
                     ln_ref, vec_ref, kv_mask_ref, seg_ones_ref, out_ref):
    # x block: (B_TILE, L, H_in) -- a tile of batch elements, fully VMEM-resident.
    bt, seq_len, h_in = x_ref.shape
    tokens = bt * seq_len
    num_blocks = w_qkv_ref.shape[0]
    d_model = w_in_ref.shape[1]
    kv_rows = kv_mask_ref.shape[0]          # num_heads * seq_len
    nh = kv_rows // seq_len

    # ---- input Linear (with bias), on the flattened token axis ----
    x = x_ref[...].reshape(tokens, h_in)
    h = jnp.dot(x, w_in_ref[...], preferred_element_type=jnp.float32)
    h = h + vec_ref[0:1, :]                                        # (T, D)

    kv_mask = kv_mask_ref[...]                                     # (nh*L, D)
    seg_ones = seg_ones_ref[...]                                   # (nh*L, nh*L)

    for blk in range(num_blocks):
        # ---- nn.MultiheadAttention(h, h, h), bias-free, batch_first ----
        # fused QKV projection; 1/sqrt(d_head) is pre-folded into the Q columns.
        qkv = jnp.dot(h, w_qkv_ref[blk], preferred_element_type=jnp.float32)
        q3 = qkv[:, 0 * d_model:1 * d_model].reshape(bt, seq_len, d_model)
        k3 = qkv[:, 1 * d_model:2 * d_model].reshape(bt, seq_len, d_model)
        v3 = qkv[:, 2 * d_model:3 * d_model].reshape(bt, seq_len, d_model)

        # masked stacked K/V: row segment h keeps only head-h columns, so
        # cross-head terms contract to zero and all heads share two batched
        # dot_generals contracting over d_model.
        k_stack = jnp.concatenate([k3] * nh, axis=1) * kv_mask     # (bt, nh*L, D)
        v_stack = jnp.concatenate([v3] * nh, axis=1) * kv_mask     # (bt, nh*L, D)

        s = jax.lax.dot_general(q3, k_stack, (((2,), (2,)), ((0,), (0,))),
                                preferred_element_type=jnp.float32)  # (bt, L, nh*L)
        # single per-row max across all heads (exact: constant shift per segment)
        s = s - jnp.max(s, axis=-1, keepdims=True)
        p = jnp.exp(s).reshape(tokens, kv_rows)
        # per-segment softmax denominators via one matmul against block-diag ones
        denom = jnp.dot(p, seg_ones, preferred_element_type=jnp.float32)
        p = (p * pl.reciprocal(denom, approx=True)).reshape(bt, seq_len, kv_rows)

        attn = jax.lax.dot_general(p, v_stack, (((2,), (1,)), ((0,), (0,))),
                                   preferred_element_type=jnp.float32)  # (bt, L, D)
        attn = jnp.dot(attn.reshape(tokens, d_model), w_of_ref[blk, 0],
                       preferred_element_type=jnp.float32)          # out_proj

        # ---- shortcut branch: LN -> PReLU -> Linear(no bias) -> LN ----
        ln_blk = ln_ref[blk]                                        # (4, D)
        y = _layer_norm(attn, ln_blk[0:1, :], ln_blk[1:2, :])
        alpha = scalars_ref[1 + blk]                                # PReLU scalar (SMEM)
        y = jnp.where(y >= 0.0, y, alpha * y)
        y = jnp.dot(y, w_of_ref[blk, 1], preferred_element_type=jnp.float32)
        y = _layer_norm(y, ln_blk[2:3, :], ln_blk[3:4, :])
        h = h + y

    # ---- output Linear(D, 1, bias=False) as VPU multiply + lane reduction,
    #      written as a lane-dense (rows, cols) slab ----
    _, rows, cols = out_ref.shape
    weighted = h * vec_ref[1:2, :]                                  # (T, D)
    logits = jnp.sum(weighted.reshape(rows, cols, d_model), axis=-1)  # (rows, cols)
    out_ref[...] = (logits * scalars_ref[0]).reshape(1, rows, cols)


def _choose_batch_tile(n, seq_len, max_tokens=2048):
    """Largest divisor of n whose flattened token count fits the per-step budget,
    preferring >= 2 grid steps so both v7x TensorCores get work."""
    divisors = [c for c in range(1, n + 1) if n % c == 0]
    budget = [c for c in divisors if c * seq_len <= max_tokens]
    if not budget:
        return 1
    two_step = [c for c in budget if c <= n // 2]
    return max(two_step) if two_step else max(budget)


def mask_generating_forward(pred_features, params):
    """Pallas version of MaskGeneratingModel.forward. Returns (N, L) mask logits."""
    n, seq_len, h_in = pred_features.shape
    num_blocks, _, d_model = params["ln"].shape
    num_heads = NUM_HEADS
    d_head = d_model // num_heads

    b_tile = _choose_batch_tile(n, seq_len)
    grid = (n // b_tile,)
    t_tile = b_tile * seq_len
    rows = 8 if t_tile % 8 == 0 else 1
    cols = t_tile // rows

    # Fold the 1/sqrt(d_head) score scale into the Q columns of the fused QKV weight
    # (packing-time transform; in production do this once when packing params).
    qkv_scale = jnp.concatenate([
        jnp.full((d_model,), 1.0 / math.sqrt(d_head), jnp.float32),
        jnp.ones((2 * d_model,), jnp.float32)])
    w_qkv = params["w_qkv"] * qkv_scale

    # Constant per-head block masks (host-side constants, replicated to every step).
    kv_mask = jnp.asarray(np.kron(np.eye(num_heads, dtype=np.float32),
                                  np.ones((seq_len, d_head), np.float32)))
    seg_ones = jnp.asarray(np.kron(np.eye(num_heads, dtype=np.float32),
                                   np.ones((seq_len, seq_len), np.float32)))

    def rep_spec(arr):  # whole (small) parameter array, replicated across the grid
        nd = arr.ndim
        return pl.BlockSpec(arr.shape, lambda b, _nd=nd: (0,) * _nd)

    # Advisory cost estimate for the XLA scheduler (kernel is latency-bound).
    kv_rows = num_heads * seq_len
    t_tokens = n * seq_len
    flops = t_tokens * (2 * h_in * d_model + 2 * d_model
                        + num_blocks * (10 * d_model * d_model
                                        + 4 * d_model * kv_rows
                                        + 2 * kv_rows * kv_rows))
    transcendentals = t_tokens * num_blocks * (2 * kv_rows + 2)
    param_elems = sum(int(np.prod(params[k].shape))
                      for k in ("w_in", "w_qkv", "w_of", "ln", "vec"))
    param_elems += int(kv_mask.size) + int(seg_ones.size)
    bytes_accessed = 4 * (int(pred_features.size) + t_tokens + param_elems)
    cost = pl.CostEstimate(flops=int(flops),
                           transcendentals=int(transcendentals),
                           bytes_accessed=int(bytes_accessed))

    out = pl.pallas_call(
        _mask_gen_kernel,
        out_shape=jax.ShapeDtypeStruct((grid[0], rows, cols), jnp.float32),
        grid=grid,
        in_specs=[
            pl.BlockSpec(memory_space=pltpu.MemorySpace.SMEM),            # scalars
            pl.BlockSpec((b_tile, seq_len, h_in), lambda b: (b, 0, 0)),   # features
            rep_spec(params["w_in"]),
            rep_spec(w_qkv),
            rep_spec(params["w_of"]),
            rep_spec(params["ln"]),
            rep_spec(params["vec"]),
            rep_spec(kv_mask),
            rep_spec(seg_ones),
        ],
        out_specs=pl.BlockSpec((1, rows, cols), lambda b: (b, 0, 0)),
        compiler_params=pltpu.CompilerParams(
            dimension_semantics=("parallel",),
            vmem_limit_bytes=32 * 1024 * 1024),
        cost_estimate=cost,
    )(params["scalars"], pred_features, params["w_in"], w_qkv,
      params["w_of"], params["ln"], params["vec"], kv_mask, seg_ones)
    return out.reshape(n, seq_len)


def init_params(key, hidden_size=HIDDEN_SIZE, d_model=MLP_HIDDEN,
                num_blocks=NUM_BLOCKS):
    """Deterministic synthetic parameters mirroring the module's __init__ shapes:
      w_qkv: (num_blocks, D, 3D)        fused q|k|v projection
      w_of : (num_blocks, 2, D, D)      [0]=attn out_proj, [1]=shortcut Linear
      ln   : (num_blocks, 4, D)         [ln1_g, ln1_b, ln2_g, ln2_b]
      vec  : (2, D)                     [input-layer bias, output-layer weight row]
      scalars (SMEM): [exp(logit_scale), prelu_alpha_0, prelu_alpha_1, ...]
    """
    ks = jax.random.split(key, 6)

    def rnd(k, shape, scale=0.05):
        return scale * jax.random.normal(k, shape, jnp.float32)

    logit_scale = 1.0                     # nn.Parameter(torch.tensor(1.0))
    prelu_alpha = 0.25                    # nn.PReLU() default (single scalar)

    ln_gain = 1.0 + rnd(ks[3], (num_blocks, 2, d_model), 0.1)
    ln_bias = rnd(ks[4], (num_blocks, 2, d_model), 0.1)
    ln = jnp.stack([ln_gain[:, 0], ln_bias[:, 0],
                    ln_gain[:, 1], ln_bias[:, 1]], axis=1)      # (nb, 4, D)

    return {
        "w_in": rnd(ks[0], (hidden_size, d_model)),
        "w_qkv": rnd(ks[1], (num_blocks, d_model, 3 * d_model)),
        "w_of": rnd(ks[2], (num_blocks, 2, d_model, d_model)),
        "ln": ln,
        "vec": rnd(ks[5], (2, d_model)),
        "scalars": jnp.concatenate([
            jnp.array([math.exp(logit_scale)], jnp.float32),
            jnp.full((num_blocks,), prelu_alpha, jnp.float32),
        ]),
    }


def reference_forward(pred_features, params):
    """Pure-JAX reference mirroring the PyTorch forward semantics."""
    sc = params["scalars"]
    num_blocks, _, d_model = params["ln"].shape
    d_head = d_model // NUM_HEADS

    h = pred_features @ params["w_in"] + params["vec"][0]
    n, seq_len, _ = h.shape
    for blk in range(num_blocks):
        qkv = h @ params["w_qkv"][blk]
        q = qkv[..., 0 * d_model:1 * d_model]
        k = qkv[..., 1 * d_model:2 * d_model]
        v = qkv[..., 2 * d_model:3 * d_model]
        qh = q.reshape(n, seq_len, NUM_HEADS, d_head)
        kh = k.reshape(n, seq_len, NUM_HEADS, d_head)
        vh = v.reshape(n, seq_len, NUM_HEADS, d_head)
        s = jnp.einsum("blhd,bmhd->bhlm", qh, kh) / math.sqrt(d_head)
        p = jax.nn.softmax(s, axis=-1)
        o = jnp.einsum("bhlm,bmhd->blhd", p, vh).reshape(n, seq_len, d_model)
        attn = o @ params["w_of"][blk, 0]
        ln = params["ln"][blk]
        y = _layer_norm(attn, ln[0], ln[1])
        y = jnp.where(y >= 0.0, y, sc[1 + blk] * y)
        y = y @ params["w_of"][blk, 1]
        y = _layer_norm(y, ln[2], ln[3])
        h = h + y
    logits = jnp.sum(h * params["vec"][1], axis=-1)
    return logits * sc[0]


# TODO(synk): generate_mask / sample_one_batch* / calculate_sim / loss_func (top-k,
# Bernoulli sampling, external language-model calls) are not part of forward() and
# are left unimplemented.

if __name__ == "__main__":
    key = jax.random.PRNGKey(0)
    pkey, xkey = jax.random.split(key)
    params = init_params(pkey)

    batch, seq_len = 2, 8
    pred_features = jax.random.normal(xkey, (batch, seq_len, HIDDEN_SIZE),
                                      jnp.float32)

    out = mask_generating_forward(pred_features, params)
    out = jax.block_until_ready(out)
    assert out.shape == (batch, seq_len)

    ref = reference_forward(pred_features, params)
    np.testing.assert_allclose(np.asarray(out), np.asarray(ref),
                               rtol=5e-3, atol=5e-3)
    print("KERNEL_OK")
</pallas_src>

<mosaic_0001>
module attributes {stable_mosaic.version = 11 : i64} {
  func.func @_mask_gen_kernel(%arg0: i32, %arg1: memref<3xf32, #tpu.memory_space<smem>>, %arg2: memref<1x8x64xf32, #tpu.memory_space<vmem>>, %arg3: memref<64x32xf32, #tpu.memory_space<vmem>>, %arg4: memref<2x32x96xf32, #tpu.memory_space<vmem>>, %arg5: memref<2x2x32x32xf32, #tpu.memory_space<vmem>>, %arg6: memref<2x4x32xf32, #tpu.memory_space<vmem>>, %arg7: memref<2x32xf32, #tpu.memory_space<vmem>>, %arg8: memref<64x32xf32, #tpu.memory_space<vmem>>, %arg9: memref<64x64xf32, #tpu.memory_space<vmem>>, %arg10: memref<1x8x1xf32, #tpu.memory_space<vmem>>) attributes {dimension_semantics = [#tpu.dimension_semantics<parallel>], iteration_bounds = array<i64: 2>, scalar_prefetch = 0 : i64, scratch_operands = 0 : i64, tpu.core_type = #tpu.core_type<tc>, window_params = [{transform_indices = @transform_0, window_bounds = array<i64: 3>}, {transform_indices = @transform_1, window_bounds = array<i64: 1, 8, 64>}, {pipeline_mode = #tpu.pipeline_mode<synchronous>, transform_indices = @transform_2, window_bounds = array<i64: 64, 32>}, {pipeline_mode = #tpu.pipeline_mode<synchronous>, transform_indices = @transform_3, window_bounds = array<i64: 2, 32, 96>}, {pipeline_mode = #tpu.pipeline_mode<synchronous>, transform_indices = @transform_4, window_bounds = array<i64: 2, 2, 32, 32>}, {pipeline_mode = #tpu.pipeline_mode<synchronous>, transform_indices = @transform_5, window_bounds = array<i64: 2, 4, 32>}, {pipeline_mode = #tpu.pipeline_mode<synchronous>, transform_indices = @transform_6, window_bounds = array<i64: 2, 32>}, {pipeline_mode = #tpu.pipeline_mode<synchronous>, transform_indices = @transform_7, window_bounds = array<i64: 64, 32>}, {pipeline_mode = #tpu.pipeline_mode<synchronous>, transform_indices = @transform_8, window_bounds = array<i64: 64, 64>}, {transform_indices = @transform_9, window_bounds = array<i64: 1, 8, 1>}]} {
    %c0 = arith.constant 0 : index
    %c0_0 = arith.constant 0 : index
    %c0_1 = arith.constant 0 : index
    %0 = vector.load %arg2[%c0, %c0_0, %c0_1] : memref<1x8x64xf32, #tpu.memory_space<vmem>>, vector<1x8x64xf32>
    %1 = vector.shape_cast %0 : vector<1x8x64xf32> to vector<8x64xf32>
    %c0_2 = arith.constant 0 : index
    %c0_3 = arith.constant 0 : index
    %2 = vector.load %arg3[%c0_2, %c0_3] : memref<64x32xf32, #tpu.memory_space<vmem>>, vector<64x32xf32>
    %cst = arith.constant dense<0.000000e+00> : vector<8x32xf32>
    %3 = tpu.matmul %1, %2, %cst {dimension_numbers = #tpu.dot_dimension_numbers<[1], [0], [0], [1], [0, 0, 1, 1], [], []>} : vector<8x64xf32>, vector<64x32xf32>, vector<8x32xf32> -> vector<8x32xf32>
    %c0_4 = arith.constant 0 : index
    %c0_5 = arith.constant 0 : index
    %4 = vector.load %arg7[%c0_4, %c0_5] : memref<2x32xf32, #tpu.memory_space<vmem>>, vector<1x32xf32>
    %5 = vector.broadcast %4 : vector<1x32xf32> to vector<8x32xf32>
    %6 = arith.addf %3, %5 : vector<8x32xf32>
    %c0_6 = arith.constant 0 : index
    %c0_7 = arith.constant 0 : index
    %7 = vector.load %arg8[%c0_6, %c0_7] : memref<64x32xf32, #tpu.memory_space<vmem>>, vector<64x32xf32>
    %c0_8 = arith.constant 0 : index
    %c0_9 = arith.constant 0 : index
    %8 = vector.load %arg9[%c0_8, %c0_9] : memref<64x64xf32, #tpu.memory_space<vmem>>, vector<64x64xf32>
    %c0_10 = arith.constant 0 : index
    %c0_11 = arith.constant 0 : index
    %c0_12 = arith.constant 0 : index
    %9 = vector.load %arg4[%c0_10, %c0_11, %c0_12] : memref<2x32x96xf32, #tpu.memory_space<vmem>>, vector<1x32x96xf32>
    %10 = vector.shape_cast %9 : vector<1x32x96xf32> to vector<32x96xf32>
    %cst_13 = arith.constant dense<0.000000e+00> : vector<8x96xf32>
    %11 = tpu.matmul %6, %10, %cst_13 {dimension_numbers = #tpu.dot_dimension_numbers<[1], [0], [0], [1], [0, 0, 1, 1], [], []>} : vector<8x32xf32>, vector<32x96xf32>, vector<8x96xf32> -> vector<8x96xf32>
    %12 = vector.extract_strided_slice %11 {offsets = [0, 0], sizes = [8, 32], strides = [1, 1]} : vector<8x96xf32> to vector<8x32xf32>
    %13 = vector.shape_cast %12 : vector<8x32xf32> to vector<1x8x32xf32>
    %14 = vector.extract_strided_slice %11 {offsets = [0, 32], sizes = [8, 32], strides = [1, 1]} : vector<8x96xf32> to vector<8x32xf32>
    %15 = vector.shape_cast %14 : vector<8x32xf32> to vector<1x8x32xf32>
    %16 = vector.extract_strided_slice %11 {offsets = [0, 64], sizes = [8, 32], strides = [1, 1]} : vector<8x96xf32> to vector<8x32xf32>
    %17 = vector.shape_cast %16 : vector<8x32xf32> to vector<1x8x32xf32>
    %18 = tpu.concatenate %15, %15, %15, %15, %15, %15, %15, %15 in 1 : vector<1x8x32xf32>, vector<1x8x32xf32>, vector<1x8x32xf32>, vector<1x8x32xf32>, vector<1x8x32xf32>, vector<1x8x32xf32>, vector<1x8x32xf32>, vector<1x8x32xf32> -> vector<1x64x32xf32>
    %19 = vector.shape_cast %7 : vector<64x32xf32> to vector<1x64x32xf32>
    %20 = arith.mulf %18, %19 : vector<1x64x32xf32>
    %21 = tpu.concatenate %17, %17, %17, %17, %17, %17, %17, %17 in 1 : vector<1x8x32xf32>, vector<1x8x32xf32>, vector<1x8x32xf32>, vector<1x8x32xf32>, vector<1x8x32xf32>, vector<1x8x32xf32>, vector<1x8x32xf32>, vector<1x8x32xf32> -> vector<1x64x32xf32>
    %22 = vector.shape_cast %7 : vector<64x32xf32> to vector<1x64x32xf32>
    %23 = arith.mulf %21, %22 : vector<1x64x32xf32>
    %cst_14 = arith.constant dense<0.000000e+00> : vector<1x8x64xf32>
    %24 = tpu.matmul %13, %20, %cst_14 {dimension_numbers = #tpu.dot_dimension_numbers<[2], [2], [1], [1], [0, 0, 0, 1, 1, 1], [0], [0]>} : vector<1x8x32xf32>, vector<1x64x32xf32>, vector<1x8x64xf32> -> vector<1x8x64xf32>
    %cst_15 = arith.constant dense<0xFF800000> : vector<1x8xf32>
    %25 = vector.multi_reduction <maximumf>, %24, %cst_15 [2] : vector<1x8x64xf32> to vector<1x8xf32>
    %26 = vector.shape_cast %25 : vector<1x8xf32> to vector<1x8x1xf32>
    %27 = vector.broadcast %26 : vector<1x8x1xf32> to vector<1x8x64xf32>
    %28 = arith.subf %24, %27 : vector<1x8x64xf32>
    %29 = math.exp %28 : vector<1x8x64xf32>
    %30 = vector.shape_cast %29 : vector<1x8x64xf32> to vector<8x64xf32>
    %cst_16 = arith.constant dense<0.000000e+00> : vector<8x64xf32>
    %31 = tpu.matmul %30, %8, %cst_16 {dimension_numbers = #tpu.dot_dimension_numbers<[1], [0], [0], [1], [0, 0, 1, 1], [], []>} : vector<8x64xf32>, vector<64x64xf32>, vector<8x64xf32> -> vector<8x64xf32>
    %32 = tpu.reciprocal %31 {approx = true} : vector<8x64xf32> -> vector<8x64xf32>
    %33 = arith.mulf %30, %32 : vector<8x64xf32>
    %34 = vector.shape_cast %33 : vector<8x64xf32> to vector<1x8x64xf32>
    %cst_17 = arith.constant dense<0.000000e+00> : vector<1x8x32xf32>
    %35 = tpu.matmul %34, %23, %cst_17 {dimension_numbers = #tpu.dot_dimension_numbers<[2], [1], [1], [2], [0, 0, 0, 1, 1, 2], [0], [0]>} : vector<1x8x64xf32>, vector<1x64x32xf32>, vector<1x8x32xf32> -> vector<1x8x32xf32>
    %36 = vector.shape_cast %35 : vector<1x8x32xf32> to vector<8x32xf32>
    %c0_18 = arith.constant 0 : index
    %c0_19 = arith.constant 0 : index
    %c0_20 = arith.constant 0 : index
    %c0_21 = arith.constant 0 : index
    %37 = vector.load %arg5[%c0_18, %c0_19, %c0_20, %c0_21] : memref<2x2x32x32xf32, #tpu.memory_space<vmem>>, vector<1x1x32x32xf32>
    %38 = vector.shape_cast %37 : vector<1x1x32x32xf32> to vector<32x32xf32>
    %cst_22 = arith.constant dense<0.000000e+00> : vector<8x32xf32>
    %39 = tpu.matmul %36, %38, %cst_22 {dimension_numbers = #tpu.dot_dimension_numbers<[1], [0], [0], [1], [0, 0, 1, 1], [], []>} : vector<8x32xf32>, vector<32x32xf32>, vector<8x32xf32> -> vector<8x32xf32>
    %c0_23 = arith.constant 0 : index
    %c0_24 = arith.constant 0 : index
    %c0_25 = arith.constant 0 : index
    %40 = vector.load %arg6[%c0_23, %c0_24, %c0_25] : memref<2x4x32xf32, #tpu.memory_space<vmem>>, vector<1x4x32xf32>
    %41 = vector.shape_cast %40 : vector<1x4x32xf32> to vector<4x32xf32>
    %42 = vector.extract_strided_slice %41 {offsets = [0, 0], sizes = [1, 32], strides = [1, 1]} : vector<4x32xf32> to vector<1x32xf32>
    %43 = vector.extract_strided_slice %41 {offsets = [1, 0], sizes = [1, 32], strides = [1, 1]} : vector<4x32xf32> to vector<1x32xf32>
    %cst_26 = arith.constant dense<0.000000e+00> : vector<8xf32>
    %44 = vector.multi_reduction <add>, %39, %cst_26 [1] : vector<8x32xf32> to vector<8xf32>
    %45 = vector.shape_cast %44 : vector<8xf32> to vector<8x1xf32>
    %cst_27 = arith.constant 3.200000e+01 : f32
    %46 = vector.broadcast %cst_27 : f32 to vector<8x1xf32>
    %47 = arith.divf %45, %46 : vector<8x1xf32>
    %48 = vector.broadcast %47 : vector<8x1xf32> to vector<8x32xf32>
    %49 = arith.subf %39, %48 : vector<8x32xf32>
    %50 = arith.mulf %49, %49 : vector<8x32xf32>
    %cst_28 = arith.constant dense<0.000000e+00> : vector<8xf32>
    %51 = vector.multi_reduction <add>, %50, %cst_28 [1] : vector<8x32xf32> to vector<8xf32>
    %52 = vector.shape_cast %51 : vector<8xf32> to vector<8x1xf32>
    %cst_29 = arith.constant 3.200000e+01 : f32
    %53 = vector.broadcast %cst_29 : f32 to vector<8x1xf32>
    %54 = arith.divf %52, %53 : vector<8x1xf32>
    %55 = vector.broadcast %47 : vector<8x1xf32> to vector<8x32xf32>
    %56 = arith.subf %39, %55 : vector<8x32xf32>
    %cst_30 = arith.constant 9.99999974E-6 : f32
    %57 = vector.broadcast %cst_30 : f32 to vector<8x1xf32>
    %58 = arith.addf %54, %57 : vector<8x1xf32>
    %59 = math.rsqrt %58 : vector<8x1xf32>
    %60 = vector.broadcast %59 : vector<8x1xf32> to vector<8x32xf32>
    %61 = arith.mulf %56, %60 : vector<8x32xf32>
    %62 = vector.broadcast %42 : vector<1x32xf32> to vector<8x32xf32>
    %63 = arith.mulf %61, %62 : vector<8x32xf32>
    %64 = vector.broadcast %43 : vector<1x32xf32> to vector<8x32xf32>
    %65 = arith.addf %63, %64 : vector<8x32xf32>
    %c1 = arith.constant 1 : index
    %66 = memref.load %arg1[%c1] : memref<3xf32, #tpu.memory_space<smem>>
    %cst_31 = arith.constant 0.000000e+00 : f32
    %67 = vector.broadcast %cst_31 : f32 to vector<8x32xf32>
    %68 = arith.cmpf oge, %65, %67 : vector<8x32xf32>
    %69 = vector.broadcast %66 : f32 to vector<8x32xf32>
    %70 = arith.mulf %69, %65 : vector<8x32xf32>
    %71 = arith.select %68, %65, %70 : vector<8x32xi1>, vector<8x32xf32>
    %c0_32 = arith.constant 0 : index
    %c1_33 = arith.constant 1 : index
    %c0_34 = arith.constant 0 : index
    %c0_35 = arith.constant 0 : index
    %72 = vector.load %arg5[%c0_32, %c1_33, %c0_34, %c0_35] : memref<2x2x32x32xf32, #tpu.memory_space<vmem>>, vector<1x1x32x32xf32>
    %73 = vector.shape_cast %72 : vector<1x1x32x32xf32> to vector<32x32xf32>
    %cst_36 = arith.constant dense<0.000000e+00> : vector<8x32xf32>
    %74 = tpu.matmul %71, %73, %cst_36 {dimension_numbers = #tpu.dot_dimension_numbers<[1], [0], [0], [1], [0, 0, 1, 1], [], []>} : vector<8x32xf32>, vector<32x32xf32>, vector<8x32xf32> -> vector<8x32xf32>
    %75 = vector.extract_strided_slice %41 {offsets = [2, 0], sizes = [1, 32], strides = [1, 1]} : vector<4x32xf32> to vector<1x32xf32>
    %76 = vector.extract_strided_slice %41 {offsets = [3, 0], sizes = [1, 32], strides = [1, 1]} : vector<4x32xf32> to vector<1x32xf32>
    %cst_37 = arith.constant dense<0.000000e+00> : vector<8xf32>
    %77 = vector.multi_reduction <add>, %74, %cst_37 [1] : vector<8x32xf32> to vector<8xf32>
    %78 = vector.shape_cast %77 : vector<8xf32> to vector<8x1xf32>
    %cst_38 = arith.constant 3.200000e+01 : f32
    %79 = vector.broadcast %cst_38 : f32 to vector<8x1xf32>
    %80 = arith.divf %78, %79 : vector<8x1xf32>
    %81 = vector.broadcast %80 : vector<8x1xf32> to vector<8x32xf32>
    %82 = arith.subf %74, %81 : vector<8x32xf32>
    %83 = arith.mulf %82, %82 : vector<8x32xf32>
    %cst_39 = arith.constant dense<0.000000e+00> : vector<8xf32>
    %84 = vector.multi_reduction <add>, %83, %cst_39 [1] : vector<8x32xf32> to vector<8xf32>
    %85 = vector.shape_cast %84 : vector<8xf32> to vector<8x1xf32>
    %cst_40 = arith.constant 3.200000e+01 : f32
    %86 = vector.broadcast %cst_40 : f32 to vector<8x1xf32>
    %87 = arith.divf %85, %86 : vector<8x1xf32>
    %88 = vector.broadcast %80 : vector<8x1xf32> to vector<8x32xf32>
    %89 = arith.subf %74, %88 : vector<8x32xf32>
    %cst_41 = arith.constant 9.99999974E-6 : f32
    %90 = vector.broadcast %cst_41 : f32 to vector<8x1xf32>
    %91 = arith.addf %87, %90 : vector<8x1xf32>
    %92 = math.rsqrt %91 : vector<8x1xf32>
    %93 = vector.broadcast %92 : vector<8x1xf32> to vector<8x32xf32>
    %94 = arith.mulf %89, %93 : vector<8x32xf32>
    %95 = vector.broadcast %75 : vector<1x32xf32> to vector<8x32xf32>
    %96 = arith.mulf %94, %95 : vector<8x32xf32>
    %97 = vector.broadcast %76 : vector<1x32xf32> to vector<8x32xf32>
    %98 = arith.addf %96, %97 : vector<8x32xf32>
    %99 = arith.addf %6, %98 : vector<8x32xf32>
    %c1_42 = arith.constant 1 : index
    %c0_43 = arith.constant 0 : index
    %c0_44 = arith.constant 0 : index
    %100 = vector.load %arg4[%c1_42, %c0_43, %c0_44] : memref<2x32x96xf32, #tpu.memory_space<vmem>>, vector<1x32x96xf32>
    %101 = vector.shape_cast %100 : vector<1x32x96xf32> to vector<32x96xf32>
    %cst_45 = arith.constant dense<0.000000e+00> : vector<8x96xf32>
    %102 = tpu.matmul %99, %101, %cst_45 {dimension_numbers = #tpu.dot_dimension_numbers<[1], [0], [0], [1], [0, 0, 1, 1], [], []>} : vector<8x32xf32>, vector<32x96xf32>, vector<8x96xf32> -> vector<8x96xf32>
    %103 = vector.extract_strided_slice %102 {offsets = [0, 0], sizes = [8, 32], strides = [1, 1]} : vector<8x96xf32> to vector<8x32xf32>
    %104 = vector.shape_cast %103 : vector<8x32xf32> to vector<1x8x32xf32>
    %105 = vector.extract_strided_slice %102 {offsets = [0, 32], sizes = [8, 32], strides = [1, 1]} : vector<8x96xf32> to vector<8x32xf32>
    %106 = vector.shape_cast %105 : vector<8x32xf32> to vector<1x8x32xf32>
    %107 = vector.extract_strided_slice %102 {offsets = [0, 64], sizes = [8, 32], strides = [1, 1]} : vector<8x96xf32> to vector<8x32xf32>
    %108 = vector.shape_cast %107 : vector<8x32xf32> to vector<1x8x32xf32>
    %109 = tpu.concatenate %106, %106, %106, %106, %106, %106, %106, %106 in 1 : vector<1x8x32xf32>, vector<1x8x32xf32>, vector<1x8x32xf32>, vector<1x8x32xf32>, vector<1x8x32xf32>, vector<1x8x32xf32>, vector<1x8x32xf32>, vector<1x8x32xf32> -> vector<1x64x32xf32>
    %110 = vector.shape_cast %7 : vector<64x32xf32> to vector<1x64x32xf32>
    %111 = arith.mulf %109, %110 : vector<1x64x32xf32>
    %112 = tpu.concatenate %108, %108, %108, %108, %108, %108, %108, %108 in 1 : vector<1x8x32xf32>, vector<1x8x32xf32>, vector<1x8x32xf32>, vector<1x8x32xf32>, vector<1x8x32xf32>, vector<1x8x32xf32>, vector<1x8x32xf32>, vector<1x8x32xf32> -> vector<1x64x32xf32>
    %113 = vector.shape_cast %7 : vector<64x32xf32> to vector<1x64x32xf32>
    %114 = arith.mulf %112, %113 : vector<1x64x32xf32>
    %cst_46 = arith.constant dense<0.000000e+00> : vector<1x8x64xf32>
    %115 = tpu.matmul %104, %111, %cst_46 {dimension_numbers = #tpu.dot_dimension_numbers<[2], [2], [1], [1], [0, 0, 0, 1, 1, 1], [0], [0]>} : vector<1x8x32xf32>, vector<1x64x32xf32>, vector<1x8x64xf32> -> vector<1x8x64xf32>
    %cst_47 = arith.constant dense<0xFF800000> : vector<1x8xf32>
    %116 = vector.multi_reduction <maximumf>, %115, %cst_47 [2] : vector<1x8x64xf32> to vector<1x8xf32>
    %117 = vector.shape_cast %116 : vector<1x8xf32> to vector<1x8x1xf32>
    %118 = vector.broadcast %117 : vector<1x8x1xf32> to vector<1x8x64xf32>
    %119 = arith.subf %115, %118 : vector<1x8x64xf32>
    %120 = math.exp %119 : vector<1x8x64xf32>
    %121 = vector.shape_cast %120 : vector<1x8x64xf32> to vector<8x64xf32>
    %cst_48 = arith.constant dense<0.000000e+00> : vector<8x64xf32>
    %122 = tpu.matmul %121, %8, %cst_48 {dimension_numbers = #tpu.dot_dimension_numbers<[1], [0], [0], [1], [0, 0, 1, 1], [], []>} : vector<8x64xf32>, vector<64x64xf32>, vector<8x64xf32> -> vector<8x64xf32>
    %123 = tpu.reciprocal %122 {approx = true} : vector<8x64xf32> -> vector<8x64xf32>
    %124 = arith.mulf %121, %123 : vector<8x64xf32>
    %125 = vector.shape_cast %124 : vector<8x64xf32> to vector<1x8x64xf32>
    %cst_49 = arith.constant dense<0.000000e+00> : vector<1x8x32xf32>
    %126 = tpu.matmul %125, %114, %cst_49 {dimension_numbers = #tpu.dot_dimension_numbers<[2], [1], [1], [2], [0, 0, 0, 1, 1, 2], [0], [0]>} : vector<1x8x64xf32>, vector<1x64x32xf32>, vector<1x8x32xf32> -> vector<1x8x32xf32>
    %127 = vector.shape_cast %126 : vector<1x8x32xf32> to vector<8x32xf32>
    %c1_50 = arith.constant 1 : index
    %c0_51 = arith.constant 0 : index
    %c0_52 = arith.constant 0 : index
    %c0_53 = arith.constant 0 : index
    %128 = vector.load %arg5[%c1_50, %c0_51, %c0_52, %c0_53] : memref<2x2x32x32xf32, #tpu.memory_space<vmem>>, vector<1x1x32x32xf32>
    %129 = vector.shape_cast %128 : vector<1x1x32x32xf32> to vector<32x32xf32>
    %cst_54 = arith.constant dense<0.000000e+00> : vector<8x32xf32>
    %130 = tpu.matmul %127, %129, %cst_54 {dimension_numbers = #tpu.dot_dimension_numbers<[1], [0], [0], [1], [0, 0, 1, 1], [], []>} : vector<8x32xf32>, vector<32x32xf32>, vector<8x32xf32> -> vector<8x32xf32>
    %c1_55 = arith.constant 1 : index
    %c0_56 = arith.constant 0 : index
    %c0_57 = arith.constant 0 : index
    %131 = vector.load %arg6[%c1_55, %c0_56, %c0_57] : memref<2x4x32xf32, #tpu.memory_space<vmem>>, vector<1x4x32xf32>
    %132 = vector.shape_cast %131 : vector<1x4x32xf32> to vector<4x32xf32>
    %133 = vector.extract_strided_slice %132 {offsets = [0, 0], sizes = [1, 32], strides = [1, 1]} : vector<4x32xf32> to vector<1x32xf32>
    %134 = vector.extract_strided_slice %132 {offsets = [1, 0], sizes = [1, 32], strides = [1, 1]} : vector<4x32xf32> to vector<1x32xf32>
    %cst_58 = arith.constant dense<0.000000e+00> : vector<8xf32>
    %135 = vector.multi_reduction <add>, %130, %cst_58 [1] : vector<8x32xf32> to vector<8xf32>
    %136 = vector.shape_cast %135 : vector<8xf32> to vector<8x1xf32>
    %cst_59 = arith.constant 3.200000e+01 : f32
    %137 = vector.broadcast %cst_59 : f32 to vector<8x1xf32>
    %138 = arith.divf %136, %137 : vector<8x1xf32>
    %139 = vector.broadcast %138 : vector<8x1xf32> to vector<8x32xf32>
    %140 = arith.subf %130, %139 : vector<8x32xf32>
    %141 = arith.mulf %140, %140 : vector<8x32xf32>
    %cst_60 = arith.constant dense<0.000000e+00> : vector<8xf32>
    %142 = vector.multi_reduction <add>, %141, %cst_60 [1] : vector<8x32xf32> to vector<8xf32>
    %143 = vector.shape_cast %142 : vector<8xf32> to vector<8x1xf32>
    %cst_61 = arith.constant 3.200000e+01 : f32
    %144 = vector.broadcast %cst_61 : f32 to vector<8x1xf32>
    %145 = arith.divf %143, %144 : vector<8x1xf32>
    %146 = vector.broadcast %138 : vector<8x1xf32> to vector<8x32xf32>
    %147 = arith.subf %130, %146 : vector<8x32xf32>
    %cst_62 = arith.constant 9.99999974E-6 : f32
    %148 = vector.broadcast %cst_62 : f32 to vector<8x1xf32>
    %149 = arith.addf %145, %148 : vector<8x1xf32>
    %150 = math.rsqrt %149 : vector<8x1xf32>
    %151 = vector.broadcast %150 : vector<8x1xf32> to vector<8x32xf32>
    %152 = arith.mulf %147, %151 : vector<8x32xf32>
    %153 = vector.broadcast %133 : vector<1x32xf32> to vector<8x32xf32>
    %154 = arith.mulf %152, %153 : vector<8x32xf32>
    %155 = vector.broadcast %134 : vector<1x32xf32> to vector<8x32xf32>
    %156 = arith.addf %154, %155 : vector<8x32xf32>
    %c2 = arith.constant 2 : index
    %157 = memref.load %arg1[%c2] : memref<3xf32, #tpu.memory_space<smem>>
    %cst_63 = arith.constant 0.000000e+00 : f32
    %158 = vector.broadcast %cst_63 : f32 to vector<8x32xf32>
    %159 = arith.cmpf oge, %156, %158 : vector<8x32xf32>
    %160 = vector.broadcast %157 : f32 to vector<8x32xf32>
    %161 = arith.mulf %160, %156 : vector<8x32xf32>
    %162 = arith.select %159, %156, %161 : vector<8x32xi1>, vector<8x32xf32>
    %c1_64 = arith.constant 1 : index
    %c1_65 = arith.constant 1 : index
    %c0_66 = arith.constant 0 : index
    %c0_67 = arith.constant 0 : index
    %163 = vector.load %arg5[%c1_64, %c1_65, %c0_66, %c0_67] : memref<2x2x32x32xf32, #tpu.memory_space<vmem>>, vector<1x1x32x32xf32>
    %164 = vector.shape_cast %163 : vector<1x1x32x32xf32> to vector<32x32xf32>
    %cst_68 = arith.constant dense<0.000000e+00> : vector<8x32xf32>
    %165 = tpu.matmul %162, %164, %cst_68 {dimension_numbers = #tpu.dot_dimension_numbers<[1], [0], [0], [1], [0, 0, 1, 1], [], []>} : vector<8x32xf32>, vector<32x32xf32>, vector<8x32xf32> -> vector<8x32xf32>
    %166 = vector.extract_strided_slice %132 {offsets = [2, 0], sizes = [1, 32], strides = [1, 1]} : vector<4x32xf32> to vector<1x32xf32>
    %167 = vector.extract_strided_slice %132 {offsets = [3, 0], sizes = [1, 32], strides = [1, 1]} : vector<4x32xf32> to vector<1x32xf32>
    %cst_69 = arith.constant dense<0.000000e+00> : vector<8xf32>
    %168 = vector.multi_reduction <add>, %165, %cst_69 [1] : vector<8x32xf32> to vector<8xf32>
    %169 = vector.shape_cast %168 : vector<8xf32> to vector<8x1xf32>
    %cst_70 = arith.constant 3.200000e+01 : f32
    %170 = vector.broadcast %cst_70 : f32 to vector<8x1xf32>
    %171 = arith.divf %169, %170 : vector<8x1xf32>
    %172 = vector.broadcast %171 : vector<8x1xf32> to vector<8x32xf32>
    %173 = arith.subf %165, %172 : vector<8x32xf32>
    %174 = arith.mulf %173, %173 : vector<8x32xf32>
    %cst_71 = arith.constant dense<0.000000e+00> : vector<8xf32>
    %175 = vector.multi_reduction <add>, %174, %cst_71 [1] : vector<8x32xf32> to vector<8xf32>
    %176 = vector.shape_cast %175 : vector<8xf32> to vector<8x1xf32>
    %cst_72 = arith.constant 3.200000e+01 : f32
    %177 = vector.broadcast %cst_72 : f32 to vector<8x1xf32>
    %178 = arith.divf %176, %177 : vector<8x1xf32>
    %179 = vector.broadcast %171 : vector<8x1xf32> to vector<8x32xf32>
    %180 = arith.subf %165, %179 : vector<8x32xf32>
    %cst_73 = arith.constant 9.99999974E-6 : f32
    %181 = vector.broadcast %cst_73 : f32 to vector<8x1xf32>
    %182 = arith.addf %178, %181 : vector<8x1xf32>
    %183 = math.rsqrt %182 : vector<8x1xf32>
    %184 = vector.broadcast %183 : vector<8x1xf32> to vector<8x32xf32>
    %185 = arith.mulf %180, %184 : vector<8x32xf32>
    %186 = vector.broadcast %166 : vector<1x32xf32> to vector<8x32xf32>
    %187 = arith.mulf %185, %186 : vector<8x32xf32>
    %188 = vector.broadcast %167 : vector<1x32xf32> to vector<8x32xf32>
    %189 = arith.addf %187, %188 : vector<8x32xf32>
    %190 = arith.addf %99, %189 : vector<8x32xf32>
    %c1_74 = arith.constant 1 : index
    %c0_75 = arith.constant 0 : index
    %191 = vector.load %arg7[%c1_74, %c0_75] : memref<2x32xf32, #tpu.memory_space<vmem>>, vector<1x32xf32>
    %192 = vector.broadcast %191 : vector<1x32xf32> to vector<8x32xf32>
    %193 = arith.mulf %190, %192 : vector<8x32xf32>
    %194 = vector.shape_cast %193 : vector<8x32xf32> to vector<8x1x32xf32>
    %cst_76 = arith.constant dense<0.000000e+00> : vector<8x1xf32>
    %195 = vector.multi_reduction <add>, %194, %cst_76 [2] : vector<8x1x32xf32> to vector<8x1xf32>
    %c0_77 = arith.constant 0 : index
    %196 = memref.load %arg1[%c0_77] : memref<3xf32, #tpu.memory_space<smem>>
    %197 = vector.broadcast %196 : f32 to vector<8x1xf32>
    %198 = arith.mulf %195, %197 : vector<8x1xf32>
    %199 = vector.shape_cast %198 : vector<8x1xf32> to vector<1x8x1xf32>
    %c0_78 = arith.constant 0 : index
    %c0_79 = arith.constant 0 : index
    %c0_80 = arith.constant 0 : index
    %200 = vector.load %arg10[%c0_78, %c0_79, %c0_80] : memref<1x8x1xf32, #tpu.memory_space<vmem>>, vector<1x8x1xf32>
    tpu.vector_store %arg10[%c0_78, %c0_79, %c0_80], %199 {strides = array<i32>} : memref<1x8x1xf32, #tpu.memory_space<vmem>>, vector<1x8x1xf32>,
    return
  }
  func.func @transform_0(%arg0: i32) -> i32 {
    %c0_i32 = arith.constant 0 : i32
    %c0_i32_0 = arith.constant 0 : i32
    return %c0_i32 : i32
  }
  func.func @transform_1(%arg0: i32) -> (i32, i32, i32) {
    %c0_i32 = arith.constant 0 : i32
    %c0_i32_0 = arith.constant 0 : i32
    %c0_i32_1 = arith.constant 0 : i32
    return %arg0, %c0_i32, %c0_i32_0 : i32, i32, i32
  }
  func.func @transform_2(%arg0: i32) -> (i32, i32) {
    %c0_i32 = arith.constant 0 : i32
    %c0_i32_0 = arith.constant 0 : i32
    %c0_i32_1 = arith.constant 0 : i32
    return %c0_i32, %c0_i32_0 : i32, i32
  }
  func.func @transform_3(%arg0: i32) -> (i32, i32, i32) {
    %c0_i32 = arith.constant 0 : i32
    %c0_i32_0 = arith.constant 0 : i32
    %c0_i32_1 = arith.constant 0 : i32
    %c0_i32_2 = arith.constant 0 : i32
    return %c0_i32, %c0_i32_0, %c0_i32_1 : i32, i32, i32
  }
  func.func @transform_4(%arg0: i32) -> (i32, i32, i32, i32) {
    %c0_i32 = arith.constant 0 : i32
    %c0_i32_0 = arith.constant 0 : i32
    %c0_i32_1 = arith.constant 0 : i32
    %c0_i32_2 = arith.constant 0 : i32
    %c0_i32_3 = arith.constant 0 : i32
    return %c0_i32, %c0_i32_0, %c0_i32_1, %c0_i32_2 : i32, i32, i32, i32
  }
  func.func @transform_5(%arg0: i32) -> (i32, i32, i32) {
    %c0_i32 = arith.constant 0 : i32
    %c0_i32_0 = arith.constant 0 : i32
    %c0_i32_1 = arith.constant 0 : i32
    %c0_i32_2 = arith.constant 0 : i32
    return %c0_i32, %c0_i32_0, %c0_i32_1 : i32, i32, i32
  }
  func.func @transform_6(%arg0: i32) -> (i32, i32) {
    %c0_i32 = arith.constant 0 : i32
    %c0_i32_0 = arith.constant 0 : i32
    %c0_i32_1 = arith.constant 0 : i32
    return %c0_i32, %c0_i32_0 : i32, i32
  }
  func.func @transform_7(%arg0: i32) -> (i32, i32) {
    %c0_i32 = arith.constant 0 : i32
    %c0_i32_0 = arith.constant 0 : i32
    %c0_i32_1 = arith.constant 0 : i32
    return %c0_i32, %c0_i32_0 : i32, i32
  }
  func.func @transform_8(%arg0: i32) -> (i32, i32) {
    %c0_i32 = arith.constant 0 : i32
    %c0_i32_0 = arith.constant 0 : i32
    %c0_i32_1 = arith.constant 0 : i32
    return %c0_i32, %c0_i32_0 : i32, i32
  }
  func.func @transform_9(%arg0: i32) -> (i32, i32, i32) {
    %c0_i32 = arith.constant 0 : i32
    %c0_i32_0 = arith.constant 0 : i32
    %c0_i32_1 = arith.constant 0 : i32
    return %arg0, %c0_i32, %c0_i32_0 : i32, i32, i32
  }
}

</mosaic_0001>

<llo_original>
// kernel: tpu_custom_call.1
$region0: #{tpu_custom_call.1}
  #allocation0 [shape = 'u32[]', space=smem, size = 0x4, offset = 0x4, fixed_abs, tag = 'smem constant byte address 0x4 - core index']
  #allocation1 [shape = 'u32[144,128]{1,0:T(1,128)}', space=vmem, size = 0x12000, scoped, tag = 'internal scratch']
  %s0 = inlined_call_operand.vmem [shape: f32[3], index: 0, kind: input, shape index: {}]
  %s1 = inlined_call_operand.hbm [shape: f32[2,8,64], index: 1, kind: input, shape index: {}]
  %s2 = inlined_call_operand.vmem [shape: f32[64,32], index: 2, kind: input, shape index: {}]
  %s3 = inlined_call_operand.vmem [shape: f32[2,32,96], index: 3, kind: input, shape index: {}]
  %s4 = inlined_call_operand.vmem [shape: f32[2,2,32,32], index: 4, kind: input, shape index: {}]
  %s5 = inlined_call_operand.vmem [shape: f32[2,4,32], index: 5, kind: input, shape index: {}]
  %s6 = inlined_call_operand.vmem [shape: f32[2,32], index: 6, kind: input, shape index: {}]
  %s7 = inlined_call_operand.vmem [shape: f32[64,32], index: 7, kind: input, shape index: {}]
  %s8 = inlined_call_operand.hbm [shape: f32[64,64], index: 8, kind: input, shape index: {}]
  %s9 = inlined_call_operand.vmem [shape: f32[2,8,1], index: 9, kind: output, shape index: {}]
  %s10 = sld [smem:[#allocation0]]
  $region81: #{tpu_custom_call.1} parent=0
    _
  %s12 = ssub.s32 1, %s10
  %s13 = scalar_select 0, %s12, %s10
  $region1: #{tpu_custom_call.1} parent=0
    #allocation2 [shape = 'u8[512]{0}', space=smem, size = 0x200, scoped, tag = 'input window, operand 0, single buffered']
    #allocation3 [shape = 's32[2]{0}', space=sflag, size = 0x8, scoped, tag = 'scoped memory for tpu_custom_call.1']
    #allocation4 [shape = 's32[2]{0}', space=sflag, size = 0x8, scoped, tag = 'scoped memory for tpu_custom_call.1']
    #allocation5 [shape = 'u8[8192]{0}', space=vmem, size = 0x2000, scoped, tag = 'input window, operand 1']
    #allocation6 [shape = 'u8[32768]{0}', space=vmem, size = 0x8000, scoped, tag = 'input window, operand 8, single buffered']
    #allocation7 [shape = 's32[1]{0}', space=sflag, size = 0x4, scoped, tag = 'scoped memory for tpu_custom_call.1']
    %14 = vsyncpa [#allocation4], 0
    %15 = vsyncpa [#allocation3], 0
    %s16 = scalar_lea.sflag [#allocation3], 1
    %17 = vsyncpa %s16, 0
    %18 = vsyncpa [#allocation7], 0
    loop: start=0, step=1, limit=4
    $region2: #{tpu_custom_call.1} parent=1 // loop_pre_header
      _
    $region3: #{tpu_custom_call.1} parent=1 // loop_header
      %s20 = sphi 0, %s24
      %p21 = scmp.ge.s32.totalorder %s20, 4
      %s28 = sphi 0, %s28
      %s30 = sphi 0, %s28
      %s31 = sphi 0, %s30
      %s45 = sphi 0, %s31
      %s51 = sphi 0, %s53
      %s54 = sphi 0, %s51
      %s55 = sphi 0, %s54
      %s71 = sphi 0, %s55
      %s75 = sphi 0, %s75
      %s77 = sphi 0, %s75
      %s78 = sphi 0, %s77
      %s92 = sphi 0, %s78
      %s96 = sphi 0, %s96
      %s98 = sphi 0, %s96
      %s99 = sphi 0, %s98
      %s113 = sphi 0, %s99
      %s117 = sphi 0, %s117
      %s119 = sphi 0, %s117
      %s120 = sphi 0, %s119
      %s134 = sphi 0, %s120
      %s138 = sphi 0, %s138
      %s140 = sphi 0, %s138
      %s141 = sphi 0, %s140
      %s155 = sphi 0, %s141
      %s159 = sphi 0, %s159
      %s161 = sphi 0, %s159
      %s162 = sphi 0, %s161
      %s176 = sphi 0, %s162
      %s180 = sphi 0, %s180
      %s182 = sphi 0, %s180
      %s183 = sphi 0, %s182
      %s197 = sphi 0, %s183
      %s201 = sphi 0, %s201
      %s203 = sphi 0, %s201
      %s204 = sphi 0, %s203
      %s218 = sphi 0, %s204
      %s224 = sphi 0, %s226
      %s227 = sphi 0, %s224
      %s228 = sphi 0, %s227
      %s244 = sphi 0, %s228
    $region4: #{tpu_custom_call.1} parent=1 // loop_header_branch
      %23 = sbr.rel (%p21) target = $region8
    $region5: #{tpu_custom_call.1} parent=1 // loop_body
      %s25 = ssub.s32 %s20, 1
      %s26 = ssub.s32 %s20, 2
      %s27 = sadd.s32 %s20, 1
      %s29 = sadd.s32 %s28, 1
      %p32 = scmp.eq.s32.totalorder %s20, 1
      %p33 = scmp.ne.s32.totalorder %s28, %s30
      %p34 = scmp.eq.s32.totalorder %s20, 0
      %p35 = por %p33, %p34
      %p36 = scmp.ne.s32.totalorder %s28, %s30
      %p37 = scmp.eq.s32.totalorder %s25, 1
      %p38 = por %p36, %p37
      %p39 = scmp.ne.s32.totalorder %s30, %s31
      %p40 = scmp.eq.s32.totalorder %s25, 0
      %p41 = por %p39, %p40
      %p42 = scmp.ne.s32.totalorder %s30, %s31
      %p43 = scmp.eq.s32.totalorder %s26, 1
      %p44 = por %p42, %p43
      %p46 = scmp.ne.s32.totalorder %s31, %s45
      %p47 = scmp.eq.s32.totalorder %s26, 0
      %p48 = por %p46, %p47
      %s49 = ssub.s32 %s20, %s27
      %p50 = scmp.eq.s32.totalorder %s49, 0
      %s52 = sadd.s32 %s51, 1
      %s53 = scalar_select %p50, %s51, %s52
      %p56 = pneg %p50
      %p57 = scmp.eq.s32.totalorder %s20, 1
      %p58 = por %p56, %p57
      %p59 = scmp.ne.s32.totalorder %s51, %s54
      %p60 = scmp.eq.s32.totalorder %s20, 0
      %p61 = por %p59, %p60
      %p62 = scmp.ne.s32.totalorder %s51, %s54
      %p63 = scmp.eq.s32.totalorder %s25, 1
      %p64 = por %p62, %p63
      %p65 = scmp.ne.s32.totalorder %s54, %s55
      %p66 = scmp.eq.s32.totalorder %s25, 0
      %p67 = por %p65, %p66
      %p68 = scmp.ne.s32.totalorder %s54, %s55
      %p69 = scmp.eq.s32.totalorder %s26, 1
      %p70 = por %p68, %p69
      %p72 = scmp.ne.s32.totalorder %s55, %s71
      %p73 = scmp.eq.s32.totalorder %s26, 0
      %p74 = por %p72, %p73
      %s76 = sadd.s32 %s75, 1
      %p79 = scmp.eq.s32.totalorder %s20, 1
      %p80 = scmp.ne.s32.totalorder %s75, %s77
      %p81 = scmp.eq.s32.totalorder %s20, 0
      %p82 = por %p80, %p81
      %p83 = scmp.ne.s32.totalorder %s75, %s77
      %p84 = scmp.eq.s32.totalorder %s25, 1
      %p85 = por %p83, %p84
      %p86 = scmp.ne.s32.totalorder %s77, %s78
      %p87 = scmp.eq.s32.totalorder %s25, 0
      %p88 = por %p86, %p87
      %p89 = scmp.ne.s32.totalorder %s77, %s78
      %p90 = scmp.eq.s32.totalorder %s26, 1
      %p91 = por %p89, %p90
      %p93 = scmp.ne.s32.totalorder %s78, %s92
      %p94 = scmp.eq.s32.totalorder %s26, 0
      %p95 = por %p93, %p94
      %s97 = sadd.s32 %s96, 1
      %p100 = scmp.eq.s32.totalorder %s20, 1
      %p101 = scmp.ne.s32.totalorder %s96, %s98
      %p102 = scmp.eq.s32.totalorder %s20, 0
      %p103 = por %p101, %p102
      %p104 = scmp.ne.s32.totalorder %s96, %s98
      %p105 = scmp.eq.s32.totalorder %s25, 1
      %p106 = por %p104, %p105
      %p107 = scmp.ne.s32.totalorder %s98, %s99
      %p108 = scmp.eq.s32.totalorder %s25, 0
      %p109 = por %p107, %p108
      %p110 = scmp.ne.s32.totalorder %s98, %s99
      %p111 = scmp.eq.s32.totalorder %s26, 1
      %p112 = por %p110, %p111
      %p114 = scmp.ne.s32.totalorder %s99, %s113
      %p115 = scmp.eq.s32.totalorder %s26, 0
      %p116 = por %p114, %p115
      %s118 = sadd.s32 %s117, 1
      %p121 = scmp.eq.s32.totalorder %s20, 1
      %p122 = scmp.ne.s32.totalorder %s117, %s119
      %p123 = scmp.eq.s32.totalorder %s20, 0
      %p124 = por %p122, %p123
      %p125 = scmp.ne.s32.totalorder %s117, %s119
      %p126 = scmp.eq.s32.totalorder %s25, 1
      %p127 = por %p125, %p126
      %p128 = scmp.ne.s32.totalorder %s119, %s120
      %p129 = scmp.eq.s32.totalorder %s25, 0
      %p130 = por %p128, %p129
      %p131 = scmp.ne.s32.totalorder %s119, %s120
      %p132 = scmp.eq.s32.totalorder %s26, 1
      %p133 = por %p131, %p132
      %p135 = scmp.ne.s32.totalorder %s120, %s134
      %p136 = scmp.eq.s32.totalorder %s26, 0
      %p137 = por %p135, %p136
      %s139 = sadd.s32 %s138, 1
      %p142 = scmp.eq.s32.totalorder %s20, 1
      %p143 = scmp.ne.s32.totalorder %s138, %s140
      %p144 = scmp.eq.s32.totalorder %s20, 0
      %p145 = por %p143, %p144
      %p146 = scmp.ne.s32.totalorder %s138, %s140
      %p147 = scmp.eq.s32.totalorder %s25, 1
      %p148 = por %p146, %p147
      %p149 = scmp.ne.s32.totalorder %s140, %s141
      %p150 = scmp.eq.s32.totalorder %s25, 0
      %p151 = por %p149, %p150
      %p152 = scmp.ne.s32.totalorder %s140, %s141
      %p153 = scmp.eq.s32.totalorder %s26, 1
      %p154 = por %p152, %p153
      %p156 = scmp.ne.s32.totalorder %s141, %s155
      %p157 = scmp.eq.s32.totalorder %s26, 0
      %p158 = por %p156, %p157
      %s160 = sadd.s32 %s159, 1
      %p163 = scmp.eq.s32.totalorder %s20, 1
      %p164 = scmp.ne.s32.totalorder %s159, %s161
      %p165 = scmp.eq.s32.totalorder %s20, 0
      %p166 = por %p164, %p165
      %p167 = scmp.ne.s32.totalorder %s159, %s161
      %p168 = scmp.eq.s32.totalorder %s25, 1
      %p169 = por %p167, %p168
      %p170 = scmp.ne.s32.totalorder %s161, %s162
      %p171 = scmp.eq.s32.totalorder %s25, 0
      %p172 = por %p170, %p171
      %p173 = scmp.ne.s32.totalorder %s161, %s162
      %p174 = scmp.eq.s32.totalorder %s26, 1
      %p175 = por %p173, %p174
      %p177 = scmp.ne.s32.totalorder %s162, %s176
      %p178 = scmp.eq.s32.totalorder %s26, 0
      %p179 = por %p177, %p178
      %s181 = sadd.s32 %s180, 1
      %p184 = scmp.eq.s32.totalorder %s20, 1
      %p185 = scmp.ne.s32.totalorder %s180, %s182
      %p186 = scmp.eq.s32.totalorder %s20, 0
      %p187 = por %p185, %p186
      %p188 = scmp.ne.s32.totalorder %s180, %s182
      %p189 = scmp.eq.s32.totalorder %s25, 1
      %p190 = por %p188, %p189
      %p191 = scmp.ne.s32.totalorder %s182, %s183
      %p192 = scmp.eq.s32.totalorder %s25, 0
      %p193 = por %p191, %p192
      %p194 = scmp.ne.s32.totalorder %s182, %s183
      %p195 = scmp.eq.s32.totalorder %s26, 1
      %p196 = por %p194, %p195
      %p198 = scmp.ne.s32.totalorder %s183, %s197
      %p199 = scmp.eq.s32.totalorder %s26, 0
      %p200 = por %p198, %p199
      %s202 = sadd.s32 %s201, 1
      %p205 = scmp.eq.s32.totalorder %s20, 1
      %p206 = scmp.ne.s32.totalorder %s201, %s203
      %p207 = scmp.eq.s32.totalorder %s20, 0
      %p208 = por %p206, %p207
      %p209 = scmp.ne.s32.totalorder %s201, %s203
      %p210 = scmp.eq.s32.totalorder %s25, 1
      %p211 = por %p209, %p210
      %p212 = scmp.ne.s32.totalorder %s203, %s204
      %p213 = scmp.eq.s32.totalorder %s25, 0
      %p214 = por %p212, %p213
      %p215 = scmp.ne.s32.totalorder %s203, %s204
      %p216 = scmp.eq.s32.totalorder %s26, 1
      %p217 = por %p215, %p216
      %p219 = scmp.ne.s32.totalorder %s204, %s218
      %p220 = scmp.eq.s32.totalorder %s26, 0
      %p221 = por %p219, %p220
      %s222 = ssub.s32 %s20, %s27
      %p223 = scmp.eq.s32.totalorder %s222, 0
      %s225 = sadd.s32 %s224, 1
      %s226 = scalar_select %p223, %s224, %s225
      %p229 = pneg %p223
      %p230 = scmp.eq.s32.totalorder %s20, 1
      %p231 = por %p229, %p230
      %p232 = scmp.ne.s32.totalorder %s224, %s227
      %p233 = scmp.eq.s32.totalorder %s20, 0
      %p234 = por %p232, %p233
      %p235 = scmp.ne.s32.totalorder %s224, %s227
      %p236 = scmp.eq.s32.totalorder %s25, 1
      %p237 = por %p235, %p236
      %p238 = scmp.ne.s32.totalorder %s227, %s228
      %p239 = scmp.eq.s32.totalorder %s25, 0
      %p240 = por %p238, %p239
      %p241 = scmp.ne.s32.totalorder %s227, %s228
      %p242 = scmp.eq.s32.totalorder %s26, 1
      %p243 = por %p241, %p242
      %p245 = scmp.ne.s32.totalorder %s228, %s244
      %p246 = scmp.eq.s32.totalorder %s26, 0
      %p247 = por %p245, %p246
      %p248 = scmp.le.s32.totalorder 1, %s20
      %p249 = scmp.lt.s32.totalorder %s20, 3
      %p250 = pnand %p248, %p249
      %p251 = pneg %p250
      // Predicated region
      $region9: #{tpu_custom_call.1} parent=5 // pred_check
        _
      $region10: #{tpu_custom_call.1} parent=5 // pred_check_branch
        %253 = sbr.rel (%p250) target = $region12
      $region11: #{tpu_custom_call.1} parent=5 // pred_region
        %s254 = ssub.s32 %s20, 1
        // Predicated region
        $region13: #{tpu_custom_call.1} parent=11 // pred_check
          %p255 = pneg %p41
        $region14: #{tpu_custom_call.1} parent=11 // pred_check_branch
          %257 = sbr.rel (%p255) target = $region16
        $region15: #{tpu_custom_call.1} parent=11 // pred_region
          %s259 = ssub.s32 16, 16
          %260 = vsyncadd [#allocation4], %s259
          %s262 = sshll.u32 %s0, 4
          %s263 = int_to_ptr.vmem [resolvable:$true] %s262
          %265 = dma.vmem_to_smem %s263, 16, [#allocation2], [#allocation4]
        $region16: #{tpu_custom_call.1} parent=11 // pred_fallthru
          _
        // Predicated region
        $region17: #{tpu_custom_call.1} parent=11 // pred_check
          %p266 = pneg %p88
        $region18: #{tpu_custom_call.1} parent=11 // pred_check_branch
          %268 = sbr.rel (%p266) target = $region20
        $region19: #{tpu_custom_call.1} parent=11 // pred_region
          _
        $region20: #{tpu_custom_call.1} parent=11 // pred_fallthru
          _
        // Predicated region
        $region21: #{tpu_custom_call.1} parent=11 // pred_check
          %p269 = pneg %p109
        $region22: #{tpu_custom_call.1} parent=11 // pred_check_branch
          %271 = sbr.rel (%p269) target = $region24
        $region23: #{tpu_custom_call.1} parent=11 // pred_region
          _
        $region24: #{tpu_custom_call.1} parent=11 // pred_fallthru
          _
        // Predicated region
        $region25: #{tpu_custom_call.1} parent=11 // pred_check
          %p272 = pneg %p130
        $region26: #{tpu_custom_call.1} parent=11 // pred_check_branch
          %274 = sbr.rel (%p272) target = $region28
        $region27: #{tpu_custom_call.1} parent=11 // pred_region
          _
        $region28: #{tpu_custom_call.1} parent=11 // pred_fallthru
          _
        // Predicated region
        $region29: #{tpu_custom_call.1} parent=11 // pred_check
          %p275 = pneg %p151
        $region30: #{tpu_custom_call.1} parent=11 // pred_check_branch
          %277 = sbr.rel (%p275) target = $region32
        $region31: #{tpu_custom_call.1} parent=11 // pred_region
          _
        $region32: #{tpu_custom_call.1} parent=11 // pred_fallthru
          _
        // Predicated region
        $region33: #{tpu_custom_call.1} parent=11 // pred_check
          %p278 = pneg %p172
        $region34: #{tpu_custom_call.1} parent=11 // pred_check_branch
          %280 = sbr.rel (%p278) target = $region36
        $region35: #{tpu_custom_call.1} parent=11 // pred_region
          _
        $region36: #{tpu_custom_call.1} parent=11 // pred_fallthru
          _
        // Predicated region
        $region37: #{tpu_custom_call.1} parent=11 // pred_check
          %p281 = pneg %p193
        $region38: #{tpu_custom_call.1} parent=11 // pred_check_branch
          %283 = sbr.rel (%p281) target = $region40
        $region39: #{tpu_custom_call.1} parent=11 // pred_region
          _
        $region40: #{tpu_custom_call.1} parent=11 // pred_fallthru
          _
        // Predicated region
        $region41: #{tpu_custom_call.1} parent=11 // pred_check
          %p284 = pneg %p214
        $region42: #{tpu_custom_call.1} parent=11 // pred_check_branch
          %286 = sbr.rel (%p284) target = $region44
        $region43: #{tpu_custom_call.1} parent=11 // pred_region
          %s288 = ssub.s32 1024, 1024
          %289 = vsyncadd [#allocation7], %s288
          %s290 = sshll.u32 [#allocation6], 4
          %s291 = int_to_ptr.vmem [resolvable:$true] %s290
          %296 = dma.hbm_to_vmem [thread:$0]  %s8, 1024, %s291, [#allocation7], 128, 128, 8
        $region44: #{tpu_custom_call.1} parent=11 // pred_fallthru
          _
      $region12: #{tpu_custom_call.1} parent=5 // pred_fallthru
        _
      %p297 = scmp.lt.s32.totalorder %s20, 2
      // Predicated region
      $region45: #{tpu_custom_call.1} parent=5 // pred_check
        %p298 = pneg %p297
      $region46: #{tpu_custom_call.1} parent=5 // pred_check_branch
        %300 = sbr.rel (%p298) target = $region48
      $region47: #{tpu_custom_call.1} parent=5 // pred_region
        // Predicated region
        $region49: #{tpu_custom_call.1} parent=47 // pred_check
          %p301 = pneg %p61
        $region50: #{tpu_custom_call.1} parent=47 // pred_check_branch
          %303 = sbr.rel (%p301) target = $region52
        $region51: #{tpu_custom_call.1} parent=47 // pred_region
          %s304 = sand.u32 %s51, 1
          %s305 = scalar_lea.sflag [#allocation3], %s304
          %s306 = sand.u32 %s51, 1
          %s307 = smul.addr %s306, 8
          %s308 = scalar_lea.vmem [#allocation5], %s307
          %s310 = ssub.s32 128, 128
          %311 = vsyncadd %s305, %s310
          %s312 = smul.addr %s20, 128
          %s313 = scalar_lea.hbm %s1, %s312
          %s315 = sshll.u32 %s308, 4
          %s316 = int_to_ptr.vmem [resolvable:$true] %s315
          %318 = dma.hbm_to_vmem [thread:$0]  %s313, 128, %s316, %s305
        $region52: #{tpu_custom_call.1} parent=47 // pred_fallthru
          _
      $region48: #{tpu_custom_call.1} parent=5 // pred_fallthru
        _
      %p319 = scmp.le.s32.totalorder 1, %s20
      %p320 = scmp.lt.s32.totalorder %s20, 3
      %p321 = pnand %p319, %p320
      %p322 = pneg %p321
      // Predicated region
      $region53: #{tpu_custom_call.1} parent=5 // pred_check
        _
      $region54: #{tpu_custom_call.1} parent=5 // pred_check_branch
        %324 = sbr.rel (%p321) target = $region56
      $region55: #{tpu_custom_call.1} parent=5 // pred_region
        %s325 = ssub.s32 %s20, 1
        // Predicated region
        $region57: #{tpu_custom_call.1} parent=55 // pred_check
          %p326 = pneg %p41
        $region58: #{tpu_custom_call.1} parent=55 // pred_check_branch
          %328 = sbr.rel (%p326) target = $region60
        $region59: #{tpu_custom_call.1} parent=55 // pred_region
          %329 = dma.done [#allocation4], 16
        $region60: #{tpu_custom_call.1} parent=55 // pred_fallthru
          _
        %s330 = sand.u32 %s54, 1
        %s331 = scalar_lea.sflag [#allocation3], %s330
        %s332 = sand.u32 %s54, 1
        %s333 = smul.addr %s332, 8
        %s334 = scalar_lea.vmem [#allocation5], %s333
        // Predicated region
        $region61: #{tpu_custom_call.1} parent=55 // pred_check
          %p335 = pneg %p67
        $region62: #{tpu_custom_call.1} parent=55 // pred_check_branch
          %337 = sbr.rel (%p335) target = $region64
        $region63: #{tpu_custom_call.1} parent=55 // pred_region
          %338 = dma.done %s331, 128
        $region64: #{tpu_custom_call.1} parent=55 // pred_fallthru
          _
        // Predicated region
        $region65: #{tpu_custom_call.1} parent=55 // pred_check
          %p339 = pneg %p214
        $region66: #{tpu_custom_call.1} parent=55 // pred_check_branch
          %341 = sbr.rel (%p339) target = $region68
        $region67: #{tpu_custom_call.1} parent=55 // pred_region
          %342 = dma.done [#allocation7], 1024
        $region68: #{tpu_custom_call.1} parent=55 // pred_fallthru
          _
        %343 = sfence
        %p344 = pneg %p41
        %p345 = pneg %p38
        %s346 = sand.u32 %s54, 1
        %s347 = scalar_lea.sflag [#allocation3], %s346
        %s348 = sand.u32 %s54, 1
        %s349 = smul.addr %s348, 8
        %s350 = scalar_lea.vmem [#allocation5], %s349
        %p351 = pneg %p67
        %p352 = pneg %p64
        %p353 = pneg %p88
        %p354 = pneg %p85
        %p355 = pneg %p109
        %p356 = pneg %p106
        %p357 = pneg %p130
        %p358 = pneg %p127
        %p359 = pneg %p151
        %p360 = pneg %p148
        %p361 = pneg %p172
        %p362 = pneg %p169
        %p363 = pneg %p193
        %p364 = pneg %p190
        %p365 = pneg %p214
        %p366 = pneg %p211
        %p367 = pneg %p240
        %p368 = pneg %p237
        %p369 = scmp.lt.s32.totalorder %s25, 1
        %s370 = scalar_select %p369, %s25, 1
        %s371 = smul.addr %s370, 8
        %s372 = scalar_lea.vmem %s9, %s371
        %p373 = scmp.lt.s32.totalorder %s25, 1
        %s374 = scalar_select %p373, %s25, 1
        %s375 = smul.addr %s374, 8
        %s376 = scalar_lea.vmem %s9, %s375
        %v377 = vld [vmem:[%s334] sm:$0xff]
        %v378 = vld [vmem:[%s2] sm:$0xff]
        %v379 = vld [vmem:[%s2 + $0x8] sm:$0xff]
        %v380 = vld [vmem:[%s2 + $0x10] sm:$0xff]
        %v381 = vld [vmem:[%s2 + $0x18] sm:$0xff]
        %v382 = vld [vmem:[%s2 + $0x20] sm:$0xff]
        %v383 = vld [vmem:[%s2 + $0x28] sm:$0xff]
        %v384 = vld [vmem:[%s2 + $0x30] sm:$0xff]
        %v385 = vld [vmem:[%s2 + $0x38] sm:$0xff]
        %v386 = vld [vmem:[%s6] sm:$0x1]
        %v387 = vlaneseq
        %v388 = vshrl.u32 %v387, 7
        %v389 = vsub.s32 0, %v388
        %v390 = vrot.slane %v386, %v389
        %vm391 = vcmask 523264
        %v393 = vsel %vm391, %v377, 0
        %395 = vmatprep.subr.mxu0 0.0
        %396 = vmatpush1.msra.mxu0 %v378
        %397 = vmatprep.subr.mxu0 0.0
        %398 = vmatpush1.msra.mxu0 %v379
        %399 = vmatprep.subr.mxu0 0.0
        %400 = vmatpush1.msra.mxu0 %v380
        %401 = vmatprep.subr.mxu0 0.0
        %402 = vmatpush1.msra.mxu0 %v381
        %403 = vmatprep.subr.mxu0 0.0
        %404 = vmatpush1.msra.mxu0 %v382
        %405 = vmatprep.subr.mxu0 0.0
        %406 = vmatpush1.msra.mxu0 %v383
        %407 = vmatprep.subr.mxu0 0.0
        %408 = vmatpush1.msra.mxu0 %v384
        %409 = vmatprep.subr.mxu0 0.0
        %410 = vmatpush1.msra.mxu0 %v385
        %411 = vmatprep.subr.mxu0 0.0
        %412 = vmatpush1.msra.mxu0 0.0
        %413 = vmatprep.subr.mxu0 0.0
        %414 = vmatpush1.msra.mxu0 0.0
        %415 = vmatprep.subr.mxu0 0.0
        %416 = vmatpush1.msra.mxu0 0.0
        %417 = vmatprep.subr.mxu0 0.0
        %418 = vmatpush1.msra.mxu0 0.0
        %419 = vmatprep.subr.mxu0 0.0
        %420 = vmatpush1.msra.mxu0 0.0
        %421 = vmatprep.subr.mxu0 0.0
        %422 = vmatpush1.msra.mxu0 0.0
        %423 = vmatprep.subr.mxu0 0.0
        %424 = vmatpush1.msra.mxu0 0.0
        %425 = vmatprep.subr.mxu0 0.0
        %426 = vmatpush1.msra.mxu0 0.0
        %427 = vmatprep.subr.mxu0 0.0
        %428 = vmatpush1.msra.mxu0 0.0
        %429 = vmatprep.subr.mxu0 0.0
        %430 = vmatpush1.msra.mxu0 0.0
        %431 = vmatprep.subr.mxu0 0.0
        %432 = vmatpush1.msra.mxu0 0.0
        %433 = vmatprep.subr.mxu0 0.0
        %434 = vmatpush1.msra.mxu0 0.0
        %435 = vmatprep.subr.mxu0 0.0
        %436 = vmatpush1.msra.mxu0 0.0
        %437 = vmatprep.subr.mxu0 0.0
        %438 = vmatpush1.msra.mxu0 0.0
        %439 = vmatprep.subr.mxu0 0.0
        %440 = vmatpush1.msra.mxu0 0.0
        %441 = vmatprep.subr.mxu0 0.0
        %442 = vmatpush1.msra.mxu0 0.0
        %443 = vmatprep.subr.mxu0 0.0
        %444 = vmatpush1.msra.mxu0 0.0
        %445 = vmatprep.subr.mxu0 0.0
        %446 = vmatpush1.msra.mxu0 0.0
        %447 = vmatprep.subr.mxu0 0.0
        %448 = vmatpush1.msra.mxu0 0.0
        %449 = vmatprep.subr.mxu0 0.0
        %450 = vmatpush1.msra.mxu0 0.0
        %451 = vmatprep.subr.mxu0 0.0
        %452 = vmatpush1.msra.mxu0 0.0
        %453 = vmatprep.subr.mxu0 0.0
        %454 = vmatpush1.msra.mxu0 0.0
        %455 = vmatprep.subr.mxu0 0.0
        %456 = vmatpush1.msra.mxu0 0.0
        %457 = vmatprep.subr.mxu0 0.0
        %458 = vmatpush1.msra.mxu0 0.0
        %459 = vmatprep.mubr.f32.mxu0 0.0
        %460 = vmatmul.mubr.f32.gmra.mrb[0].mxu0 %v393
        %v461 = vpop.f32.mrb[0].mxu0
        %v462 = vadd.f32 %v390, %v461
        %v463 = vpop.f32.mrb[0].mxu0
        %464 = vdwg.mxu0
        %v465 = vld [vmem:[%s7] sm:$0xff]
        %v466 = vld [vmem:[%s7 + $0x8] sm:$0xff]
        %v467 = vld [vmem:[%s7 + $0x10] sm:$0xff]
        %v468 = vld [vmem:[%s7 + $0x18] sm:$0xff]
        %v469 = vld [vmem:[%s7 + $0x20] sm:$0xff]
        %v470 = vld [vmem:[%s7 + $0x28] sm:$0xff]
        %v471 = vld [vmem:[%s7 + $0x30] sm:$0xff]
        %v472 = vld [vmem:[%s7 + $0x38] sm:$0xff]
        %v473 = vld [vmem:[#allocation6] sm:$0xff]
        %v474 = vld [vmem:[#allocation6 + $0x8] sm:$0xff]
        %v475 = vld [vmem:[#allocation6 + $0x10] sm:$0xff]
        %v476 = vld [vmem:[#allocation6 + $0x18] sm:$0xff]
        %v477 = vld [vmem:[#allocation6 + $0x20] sm:$0xff]
        %v478 = vld [vmem:[#allocation6 + $0x28] sm:$0xff]
        %v479 = vld [vmem:[#allocation6 + $0x30] sm:$0xff]
        %v480 = vld [vmem:[#allocation6 + $0x38] sm:$0xff]
        %v481 = vld [vmem:[%s3] sm:$0xff]
        %v482 = vld [vmem:[%s3 + $0x8] sm:$0xff]
        %v483 = vld [vmem:[%s3 + $0x10] sm:$0xff]
        %v484 = vld [vmem:[%s3 + $0x18] sm:$0xff]
        %vm485 = vcmask 261120
        %v487 = vsel %vm485, %v462, 0
        %489 = vmatprep.subr.mxu0 0.0
        %490 = vmatpush1.msra.mxu0 %v481
        %491 = vmatprep.subr.mxu0 0.0
        %492 = vmatpush1.msra.mxu0 %v482
        %493 = vmatprep.subr.mxu0 0.0
        %494 = vmatpush1.msra.mxu0 %v483
        %495 = vmatprep.subr.mxu0 0.0
        %496 = vmatpush1.msra.mxu0 %v484
        %497 = vmatprep.subr.mxu0 0.0
        %498 = vmatpush1.msra.mxu0 0.0
        %499 = vmatprep.subr.mxu0 0.0
        %500 = vmatpush1.msra.mxu0 0.0
        %501 = vmatprep.subr.mxu0 0.0
        %502 = vmatpush1.msra.mxu0 0.0
        %503 = vmatprep.subr.mxu0 0.0
        %504 = vmatpush1.msra.mxu0 0.0
        %505 = vmatprep.subr.mxu0 0.0
        %506 = vmatpush1.msra.mxu0 0.0
        %507 = vmatprep.subr.mxu0 0.0
        %508 = vmatpush1.msra.mxu0 0.0
        %509 = vmatprep.subr.mxu0 0.0
        %510 = vmatpush1.msra.mxu0 0.0
        %511 = vmatprep.subr.mxu0 0.0
        %512 = vmatpush1.msra.mxu0 0.0
        %513 = vmatprep.subr.mxu0 0.0
        %514 = vmatpush1.msra.mxu0 0.0
        %515 = vmatprep.subr.mxu0 0.0
        %516 = vmatpush1.msra.mxu0 0.0
        %517 = vmatprep.subr.mxu0 0.0
        %518 = vmatpush1.msra.mxu0 0.0
        %519 = vmatprep.subr.mxu0 0.0
        %520 = vmatpush1.msra.mxu0 0.0
        %521 = vmatprep.subr.mxu0 0.0
        %522 = vmatpush1.msra.mxu0 0.0
        %523 = vmatprep.subr.mxu0 0.0
        %524 = vmatpush1.msra.mxu0 0.0
        %525 = vmatprep.subr.mxu0 0.0
        %526 = vmatpush1.msra.mxu0 0.0
        %527 = vmatprep.subr.mxu0 0.0
        %528 = vmatpush1.msra.mxu0 0.0
        %529 = vmatprep.subr.mxu0 0.0
        %530 = vmatpush1.msra.mxu0 0.0
        %531 = vmatprep.subr.mxu0 0.0
        %532 = vmatpush1.msra.mxu0 0.0
        %533 = vmatprep.subr.mxu0 0.0
        %534 = vmatpush1.msra.mxu0 0.0
        %535 = vmatprep.subr.mxu0 0.0
        %536 = vmatpush1.msra.mxu0 0.0
        %537 = vmatprep.subr.mxu0 0.0
        %538 = vmatpush1.msra.mxu0 0.0
        %539 = vmatprep.subr.mxu0 0.0
        %540 = vmatpush1.msra.mxu0 0.0
        %541 = vmatprep.subr.mxu0 0.0
        %542 = vmatpush1.msra.mxu0 0.0
        %543 = vmatprep.subr.mxu0 0.0
        %544 = vmatpush1.msra.mxu0 0.0
        %545 = vmatprep.subr.mxu0 0.0
        %546 = vmatpush1.msra.mxu0 0.0
        %547 = vmatprep.subr.mxu0 0.0
        %548 = vmatpush1.msra.mxu0 0.0
        %549 = vmatprep.subr.mxu0 0.0
        %550 = vmatpush1.msra.mxu0 0.0
        %551 = vmatprep.subr.mxu0 0.0
        %552 = vmatpush1.msra.mxu0 0.0
        %553 = vmatprep.mubr.f32.mxu0 0.0
        %554 = vmatmul.mubr.f32.gmra.mrb[0].mxu0 %v487
        %v555 = vpop.f32.mrb[0].mxu0
        %v556 = vadd.f32 0.0, %v555
        %v557 = vpop.f32.mrb[0].mxu0
        %558 = vdwg.mxu0
        %567 = vrot.lane.b32.xlu0 %v465, 32
        %v568 = vpop.permute.xlu0 %567
        %569 = vrot.lane.b32.xlu0 %v466, 32
        %v570 = vpop.permute.xlu0 %569
        %571 = vrot.lane.b32.xlu0 %v467, 32
        %v572 = vpop.permute.xlu0 %571
        %573 = vrot.lane.b32.xlu0 %v468, 32
        %v574 = vpop.permute.xlu0 %573
        %575 = vrot.lane.b32.xlu0 %v469, 32
        %v576 = vpop.permute.xlu0 %575
        %577 = vrot.lane.b32.xlu0 %v470, 32
        %v578 = vpop.permute.xlu0 %577
        %579 = vrot.lane.b32.xlu0 %v471, 32
        %v580 = vpop.permute.xlu0 %579
        %581 = vrot.lane.b32.xlu0 %v472, 32
        %v582 = vpop.permute.xlu0 %581
        %v591 = vmul.f32 %v556, %v568
        %v592 = vmul.f32 %v556, %v570
        %v593 = vmul.f32 %v556, %v572
        %v594 = vmul.f32 %v556, %v574
        %v595 = vmul.f32 %v556, %v576
        %v596 = vmul.f32 %v556, %v578
        %v597 = vmul.f32 %v556, %v580
        %v598 = vmul.f32 %v556, %v582
        %599 = vrot.lane.b32.xlu0 %v465, 64
        %v600 = vpop.permute.xlu0 %599
        %601 = vrot.lane.b32.xlu0 %v466, 64
        %v602 = vpop.permute.xlu0 %601
        %603 = vrot.lane.b32.xlu0 %v467, 64
        %v604 = vpop.permute.xlu0 %603
        %605 = vrot.lane.b32.xlu0 %v468, 64
        %v606 = vpop.permute.xlu0 %605
        %607 = vrot.lane.b32.xlu0 %v469, 64
        %v608 = vpop.permute.xlu0 %607
        %609 = vrot.lane.b32.xlu0 %v470, 64
        %v610 = vpop.permute.xlu0 %609
        %611 = vrot.lane.b32.xlu0 %v471, 64
        %v612 = vpop.permute.xlu0 %611
        %613 = vrot.lane.b32.xlu0 %v472, 64
        %v614 = vpop.permute.xlu0 %613
        %v623 = vmul.f32 %v556, %v600
        %v624 = vmul.f32 %v556, %v602
        %v625 = vmul.f32 %v556, %v604
        %v626 = vmul.f32 %v556, %v606
        %v627 = vmul.f32 %v556, %v608
        %v628 = vmul.f32 %v556, %v610
        %v629 = vmul.f32 %v556, %v612
        %v630 = vmul.f32 %v556, %v614
        %639 = vrot.lane.b32.xlu0 %v591, 96
        %v640 = vpop.permute.xlu0 %639
        %641 = vrot.lane.b32.xlu0 %v592, 96
        %v642 = vpop.permute.xlu0 %641
        %643 = vrot.lane.b32.xlu0 %v593, 96
        %v644 = vpop.permute.xlu0 %643
        %645 = vrot.lane.b32.xlu0 %v594, 96
        %v646 = vpop.permute.xlu0 %645
        %647 = vrot.lane.b32.xlu0 %v595, 96
        %v648 = vpop.permute.xlu0 %647
        %649 = vrot.lane.b32.xlu0 %v596, 96
        %v650 = vpop.permute.xlu0 %649
        %651 = vrot.lane.b32.xlu0 %v597, 96
        %v652 = vpop.permute.xlu0 %651
        %653 = vrot.lane.b32.xlu0 %v598, 96
        %v654 = vpop.permute.xlu0 %653
        %v656 = vsel %vm485, %v556, 0
        %v658 = vsel %vm485, %v640, 0
        %v660 = vsel %vm485, %v642, 0
        %v662 = vsel %vm485, %v644, 0
        %v664 = vsel %vm485, %v646, 0
        %v666 = vsel %vm485, %v648, 0
        %v668 = vsel %vm485, %v650, 0
        %v670 = vsel %vm485, %v652, 0
        %v672 = vsel %vm485, %v654, 0
        %674 = vmatprep.subr.mxu0 0.0
        %675 = vmatpush1.xpose.msra.mxu0 %v658
        %676 = vmatprep.subr.mxu0 0.0
        %677 = vmatpush1.xpose.msra.mxu0 %v660
        %678 = vmatprep.subr.mxu0 0.0
        %679 = vmatpush1.xpose.msra.mxu0 %v662
        %680 = vmatprep.subr.mxu0 0.0
        %681 = vmatpush1.xpose.msra.mxu0 %v664
        %682 = vmatprep.subr.mxu0 0.0
        %683 = vmatpush1.xpose.msra.mxu0 %v666
        %684 = vmatprep.subr.mxu0 0.0
        %685 = vmatpush1.xpose.msra.mxu0 %v668
        %686 = vmatprep.subr.mxu0 0.0
        %687 = vmatpush1.xpose.msra.mxu0 %v670
        %688 = vmatprep.subr.mxu0 0.0
        %689 = vmatpush1.xpose.msra.mxu0 %v672
        %690 = vmatprep.subr.mxu0 0.0
        %691 = vmatpush1.xpose.msra.mxu0 0.0
        %692 = vmatprep.subr.mxu0 0.0
        %693 = vmatpush1.xpose.msra.mxu0 0.0
        %694 = vmatprep.subr.mxu0 0.0
        %695 = vmatpush1.xpose.msra.mxu0 0.0
        %696 = vmatprep.subr.mxu0 0.0
        %697 = vmatpush1.xpose.msra.mxu0 0.0
        %698 = vmatprep.subr.mxu0 0.0
        %699 = vmatpush1.xpose.msra.mxu0 0.0
        %700 = vmatprep.subr.mxu0 0.0
        %701 = vmatpush1.xpose.msra.mxu0 0.0
        %702 = vmatprep.subr.mxu0 0.0
        %703 = vmatpush1.xpose.msra.mxu0 0.0
        %704 = vmatprep.subr.mxu0 0.0
        %705 = vmatpush1.xpose.msra.mxu0 0.0
        %706 = vmatprep.subr.mxu0 0.0
        %707 = vmatpush1.xpose.msra.mxu0 0.0
        %708 = vmatprep.subr.mxu0 0.0
        %709 = vmatpush1.xpose.msra.mxu0 0.0
        %710 = vmatprep.subr.mxu0 0.0
        %711 = vmatpush1.xpose.msra.mxu0 0.0
        %712 = vmatprep.subr.mxu0 0.0
        %713 = vmatpush1.xpose.msra.mxu0 0.0
        %714 = vmatprep.subr.mxu0 0.0
        %715 = vmatpush1.xpose.msra.mxu0 0.0
        %716 = vmatprep.subr.mxu0 0.0
        %717 = vmatpush1.xpose.msra.mxu0 0.0
        %718 = vmatprep.subr.mxu0 0.0
        %719 = vmatpush1.xpose.msra.mxu0 0.0
        %720 = vmatprep.subr.mxu0 0.0
        %721 = vmatpush1.xpose.msra.mxu0 0.0
        %722 = vmatprep.subr.mxu0 0.0
        %723 = vmatpush1.xpose.msra.mxu0 0.0
        %724 = vmatprep.subr.mxu0 0.0
        %725 = vmatpush1.xpose.msra.mxu0 0.0
        %726 = vmatprep.subr.mxu0 0.0
        %727 = vmatpush1.xpose.msra.mxu0 0.0
        %728 = vmatprep.subr.mxu0 0.0
        %729 = vmatpush1.xpose.msra.mxu0 0.0
        %730 = vmatprep.subr.mxu0 0.0
        %731 = vmatpush1.xpose.msra.mxu0 0.0
        %732 = vmatprep.subr.mxu0 0.0
        %733 = vmatpush1.xpose.msra.mxu0 0.0
        %734 = vmatprep.subr.mxu0 0.0
        %735 = vmatpush1.xpose.msra.mxu0 0.0
        %736 = vmatprep.subr.mxu0 0.0
        %737 = vmatpush1.xpose.msra.mxu0 0.0
        %738 = vmatprep.mubr.f32.mxu0 0.0
        %739 = vmatmul.mubr.f32.gmra.mrb[0].mxu0 %v656
        %v740 = vpop.f32.mrb[0].mxu0
        %v741 = vadd.f32 0.0, %v740
        %v742 = vpop.f32.mrb[0].mxu0
        %743 = vdwg.mxu0
        %v744 = vsel %vm391, %v741, -inf
        %745 = vmax.xlane.f32.xlu0 %v744
        %v746 = vpop.xlane.xlu0 %745
        %v747 = vsub.f32 %v741, %v746
        %v748 = vmul.f32 %v747, 1.442695
        %v749 = vpow.pop %v748
        %v751 = vsel %vm391, %v749, 0
        %753 = vmatprep.subr.mxu0 0.0
        %754 = vmatpush1.msra.mxu0 %v473
        %755 = vmatprep.subr.mxu0 0.0
        %756 = vmatpush1.msra.mxu0 %v474
        %757 = vmatprep.subr.mxu0 0.0
        %758 = vmatpush1.msra.mxu0 %v475
        %759 = vmatprep.subr.mxu0 0.0
        %760 = vmatpush1.msra.mxu0 %v476
        %761 = vmatprep.subr.mxu0 0.0
        %762 = vmatpush1.msra.mxu0 %v477
        %763 = vmatprep.subr.mxu0 0.0
        %764 = vmatpush1.msra.mxu0 %v478
        %765 = vmatprep.subr.mxu0 0.0
        %766 = vmatpush1.msra.mxu0 %v479
        %767 = vmatprep.subr.mxu0 0.0
        %768 = vmatpush1.msra.mxu0 %v480
        %769 = vmatprep.subr.mxu0 0.0
        %770 = vmatpush1.msra.mxu0 0.0
        %771 = vmatprep.subr.mxu0 0.0
        %772 = vmatpush1.msra.mxu0 0.0
        %773 = vmatprep.subr.mxu0 0.0
        %774 = vmatpush1.msra.mxu0 0.0
        %775 = vmatprep.subr.mxu0 0.0
        %776 = vmatpush1.msra.mxu0 0.0
        %777 = vmatprep.subr.mxu0 0.0
        %778 = vmatpush1.msra.mxu0 0.0
        %779 = vmatprep.subr.mxu0 0.0
        %780 = vmatpush1.msra.mxu0 0.0
        %781 = vmatprep.subr.mxu0 0.0
        %782 = vmatpush1.msra.mxu0 0.0
        %783 = vmatprep.subr.mxu0 0.0
        %784 = vmatpush1.msra.mxu0 0.0
        %785 = vmatprep.subr.mxu0 0.0
        %786 = vmatpush1.msra.mxu0 0.0
        %787 = vmatprep.subr.mxu0 0.0
        %788 = vmatpush1.msra.mxu0 0.0
        %789 = vmatprep.subr.mxu0 0.0
        %790 = vmatpush1.msra.mxu0 0.0
        %791 = vmatprep.subr.mxu0 0.0
        %792 = vmatpush1.msra.mxu0 0.0
        %793 = vmatprep.subr.mxu0 0.0
        %794 = vmatpush1.msra.mxu0 0.0
        %795 = vmatprep.subr.mxu0 0.0
        %796 = vmatpush1.msra.mxu0 0.0
        %797 = vmatprep.subr.mxu0 0.0
        %798 = vmatpush1.msra.mxu0 0.0
        %799 = vmatprep.subr.mxu0 0.0
        %800 = vmatpush1.msra.mxu0 0.0
        %801 = vmatprep.subr.mxu0 0.0
        %802 = vmatpush1.msra.mxu0 0.0
        %803 = vmatprep.subr.mxu0 0.0
        %804 = vmatpush1.msra.mxu0 0.0
        %805 = vmatprep.subr.mxu0 0.0
        %806 = vmatpush1.msra.mxu0 0.0
        %807 = vmatprep.subr.mxu0 0.0
        %808 = vmatpush1.msra.mxu0 0.0
        %809 = vmatprep.subr.mxu0 0.0
        %810 = vmatpush1.msra.mxu0 0.0
        %811 = vmatprep.subr.mxu0 0.0
        %812 = vmatpush1.msra.mxu0 0.0
        %813 = vmatprep.subr.mxu0 0.0
        %814 = vmatpush1.msra.mxu0 0.0
        %815 = vmatprep.subr.mxu0 0.0
        %816 = vmatpush1.msra.mxu0 0.0
        %817 = vmatprep.mubr.f32.mxu0 0.0
        %818 = vmatmul.mubr.f32.gmra.mrb[0].mxu0 %v751
        %v819 = vpop.f32.mrb[0].mxu0
        %v820 = vadd.f32 0.0, %v819
        %v821 = vpop.f32.mrb[0].mxu0
        %822 = vdwg.mxu0
        %v823 = vrcp.pop %v820
        %v824 = vmul.f32 %v749, %v823
        %833 = vrot.lane.b32.xlu0 %v623, 64
        %v834 = vpop.permute.xlu0 %833
        %835 = vrot.lane.b32.xlu0 %v624, 64
        %v836 = vpop.permute.xlu0 %835
        %837 = vrot.lane.b32.xlu0 %v625, 64
        %v838 = vpop.permute.xlu0 %837
        %839 = vrot.lane.b32.xlu0 %v626, 64
        %v840 = vpop.permute.xlu0 %839
        %841 = vrot.lane.b32.xlu0 %v627, 64
        %v842 = vpop.permute.xlu0 %841
        %843 = vrot.lane.b32.xlu0 %v628, 64
        %v844 = vpop.permute.xlu0 %843
        %845 = vrot.lane.b32.xlu0 %v629, 64
        %v846 = vpop.permute.xlu0 %845
        %847 = vrot.lane.b32.xlu0 %v630, 64
        %v848 = vpop.permute.xlu0 %847
        %v858 = vsel %vm391, %v824, 0
        %860 = vmatprep.subr.mxu0 0.0
        %861 = vmatpush1.msra.mxu0 %v834
        %862 = vmatprep.subr.mxu0 0.0
        %863 = vmatpush1.msra.mxu0 %v836
        %864 = vmatprep.subr.mxu0 0.0
        %865 = vmatpush1.msra.mxu0 %v838
        %866 = vmatprep.subr.mxu0 0.0
        %867 = vmatpush1.msra.mxu0 %v840
        %868 = vmatprep.subr.mxu0 0.0
        %869 = vmatpush1.msra.mxu0 %v842
        %870 = vmatprep.subr.mxu0 0.0
        %871 = vmatpush1.msra.mxu0 %v844
        %872 = vmatprep.subr.mxu0 0.0
        %873 = vmatpush1.msra.mxu0 %v846
        %874 = vmatprep.subr.mxu0 0.0
        %875 = vmatpush1.msra.mxu0 %v848
        %876 = vmatprep.subr.mxu0 0.0
        %877 = vmatpush1.msra.mxu0 0.0
        %878 = vmatprep.subr.mxu0 0.0
        %879 = vmatpush1.msra.mxu0 0.0
        %880 = vmatprep.subr.mxu0 0.0
        %881 = vmatpush1.msra.mxu0 0.0
        %882 = vmatprep.subr.mxu0 0.0
        %883 = vmatpush1.msra.mxu0 0.0
        %884 = vmatprep.subr.mxu0 0.0
        %885 = vmatpush1.msra.mxu0 0.0
        %886 = vmatprep.subr.mxu0 0.0
        %887 = vmatpush1.msra.mxu0 0.0
        %888 = vmatprep.subr.mxu0 0.0
        %889 = vmatpush1.msra.mxu0 0.0
        %890 = vmatprep.subr.mxu0 0.0
        %891 = vmatpush1.msra.mxu0 0.0
        %892 = vmatprep.subr.mxu0 0.0
        %893 = vmatpush1.msra.mxu0 0.0
        %894 = vmatprep.subr.mxu0 0.0
        %895 = vmatpush1.msra.mxu0 0.0
        %896 = vmatprep.subr.mxu0 0.0
        %897 = vmatpush1.msra.mxu0 0.0
        %898 = vmatprep.subr.mxu0 0.0
        %899 = vmatpush1.msra.mxu0 0.0
        %900 = vmatprep.subr.mxu0 0.0
        %901 = vmatpush1.msra.mxu0 0.0
        %902 = vmatprep.subr.mxu0 0.0
        %903 = vmatpush1.msra.mxu0 0.0
        %904 = vmatprep.subr.mxu0 0.0
        %905 = vmatpush1.msra.mxu0 0.0
        %906 = vmatprep.subr.mxu0 0.0
        %907 = vmatpush1.msra.mxu0 0.0
        %908 = vmatprep.subr.mxu0 0.0
        %909 = vmatpush1.msra.mxu0 0.0
        %910 = vmatprep.subr.mxu0 0.0
        %911 = vmatpush1.msra.mxu0 0.0
        %912 = vmatprep.subr.mxu0 0.0
        %913 = vmatpush1.msra.mxu0 0.0
        %914 = vmatprep.subr.mxu0 0.0
        %915 = vmatpush1.msra.mxu0 0.0
        %916 = vmatprep.subr.mxu0 0.0
        %917 = vmatpush1.msra.mxu0 0.0
        %918 = vmatprep.subr.mxu0 0.0
        %919 = vmatpush1.msra.mxu0 0.0
        %920 = vmatprep.subr.mxu0 0.0
        %921 = vmatpush1.msra.mxu0 0.0
        %922 = vmatprep.subr.mxu0 0.0
        %923 = vmatpush1.msra.mxu0 0.0
        %924 = vmatprep.mubr.f32.mxu0 0.0
        %925 = vmatmul.mubr.f32.gmra.mrb[0].mxu0 %v858
        %v926 = vpop.f32.mrb[0].mxu0
        %v927 = vadd.f32 0.0, %v926
        %v928 = vpop.f32.mrb[0].mxu0
        %929 = vdwg.mxu0
        %v930 = vld [vmem:[%s4] sm:$0xff]
        %v931 = vld [vmem:[%s4 + $0x8] sm:$0xff]
        %v932 = vld [vmem:[%s4 + $0x10] sm:$0xff]
        %v933 = vld [vmem:[%s4 + $0x18] sm:$0xff]
        %v935 = vsel %vm485, %v927, 0
        %937 = vmatprep.subr.mxu0 0.0
        %938 = vmatpush1.msra.mxu0 %v930
        %939 = vmatprep.subr.mxu0 0.0
        %940 = vmatpush1.msra.mxu0 %v931
        %941 = vmatprep.subr.mxu0 0.0
        %942 = vmatpush1.msra.mxu0 %v932
        %943 = vmatprep.subr.mxu0 0.0
        %944 = vmatpush1.msra.mxu0 %v933
        %945 = vmatprep.subr.mxu0 0.0
        %946 = vmatpush1.msra.mxu0 0.0
        %947 = vmatprep.subr.mxu0 0.0
        %948 = vmatpush1.msra.mxu0 0.0
        %949 = vmatprep.subr.mxu0 0.0
        %950 = vmatpush1.msra.mxu0 0.0
        %951 = vmatprep.subr.mxu0 0.0
        %952 = vmatpush1.msra.mxu0 0.0
        %953 = vmatprep.subr.mxu0 0.0
        %954 = vmatpush1.msra.mxu0 0.0
        %955 = vmatprep.subr.mxu0 0.0
        %956 = vmatpush1.msra.mxu0 0.0
        %957 = vmatprep.subr.mxu0 0.0
        %958 = vmatpush1.msra.mxu0 0.0
        %959 = vmatprep.subr.mxu0 0.0
        %960 = vmatpush1.msra.mxu0 0.0
        %961 = vmatprep.subr.mxu0 0.0
        %962 = vmatpush1.msra.mxu0 0.0
        %963 = vmatprep.subr.mxu0 0.0
        %964 = vmatpush1.msra.mxu0 0.0
        %965 = vmatprep.subr.mxu0 0.0
        %966 = vmatpush1.msra.mxu0 0.0
        %967 = vmatprep.subr.mxu0 0.0
        %968 = vmatpush1.msra.mxu0 0.0
        %969 = vmatprep.subr.mxu0 0.0
        %970 = vmatpush1.msra.mxu0 0.0
        %971 = vmatprep.subr.mxu0 0.0
        %972 = vmatpush1.msra.mxu0 0.0
        %973 = vmatprep.subr.mxu0 0.0
        %974 = vmatpush1.msra.mxu0 0.0
        %975 = vmatprep.subr.mxu0 0.0
        %976 = vmatpush1.msra.mxu0 0.0
        %977 = vmatprep.subr.mxu0 0.0
        %978 = vmatpush1.msra.mxu0 0.0
        %979 = vmatprep.subr.mxu0 0.0
        %980 = vmatpush1.msra.mxu0 0.0
        %981 = vmatprep.subr.mxu0 0.0
        %982 = vmatpush1.msra.mxu0 0.0
        %983 = vmatprep.subr.mxu0 0.0
        %984 = vmatpush1.msra.mxu0 0.0
        %985 = vmatprep.subr.mxu0 0.0
        %986 = vmatpush1.msra.mxu0 0.0
        %987 = vmatprep.subr.mxu0 0.0
        %988 = vmatpush1.msra.mxu0 0.0
        %989 = vmatprep.subr.mxu0 0.0
        %990 = vmatpush1.msra.mxu0 0.0
        %991 = vmatprep.subr.mxu0 0.0
        %992 = vmatpush1.msra.mxu0 0.0
        %993 = vmatprep.subr.mxu0 0.0
        %994 = vmatpush1.msra.mxu0 0.0
        %995 = vmatprep.subr.mxu0 0.0
        %996 = vmatpush1.msra.mxu0 0.0
        %997 = vmatprep.subr.mxu0 0.0
        %998 = vmatpush1.msra.mxu0 0.0
        %999 = vmatprep.subr.mxu0 0.0
        %1000 = vmatpush1.msra.mxu0 0.0
        %1001 = vmatprep.mubr.f32.mxu0 0.0
        %1002 = vmatmul.mubr.f32.gmra.mrb[0].mxu0 %v935
        %v1003 = vpop.f32.mrb[0].mxu0
        %v1004 = vadd.f32 0.0, %v1003
        %v1005 = vpop.f32.mrb[0].mxu0
        %1006 = vdwg.mxu0
        %v1007 = vld [vmem:[%s5] sm:$0xf]
        %v1008 = vsel %vm485, %v1004, 0.0
        %1009 = vadd.xlane.f32.xlu0 %v1008
        %v1010 = vpop.xlane.xlu0 %1009
        %v1011 = vrcp.pop 32.0
        %v1012 = vmul.f32 %v1010, %v1011
        %v1013 = vsub.f32 %v1004, %v1012
        %v1014 = vmul.f32 %v1013, %v1013
        %v1015 = vsel %vm485, %v1014, 0.0
        %1016 = vadd.xlane.f32.xlu0 %v1015
        %v1017 = vpop.xlane.xlu0 %1016
        %v1018 = vmul.f32 %v1017, %v1011
        %v1019 = vadd.f32 %v1018, 1e-05
        %v1020 = vrsqrt.pop %v1019
        %v1021 = vmul.f32 %v1013, %v1020
        %v1022 = vlaneseq
        %v1023 = vshrl.u32 %v1022, 7
        %v1024 = vsub.s32 0, %v1023
        %v1025 = vrot.slane %v1007, %v1024
        %v1026 = vmul.f32 %v1021, %v1025
        %v1027 = vlaneseq
        %v1028 = vshrl.u32 %v1027, 7
        %v1029 = vsub.s32 1, %v1028
        %v1030 = vrot.slane %v1007, %v1029
        %v1031 = vadd.f32 %v1026, %v1030
        %s1032 = sld [smem:[#allocation2 + $0x1]]
        %vm1033 = vcmp.ge.f32.partialorder %v1031, 0.0
        %v1034 = vstv %s1032
        %v1035 = vmul.f32 %v1034, %v1031
        %v1036 = vsel %vm1033, %v1031, %v1035
        %s1037 = scalar_lea.vmem %s4, 32
        %v1038 = vld [vmem:[%s1037] sm:$0xff]
        %v1039 = vld [vmem:[%s1037 + $0x8] sm:$0xff]
        %v1040 = vld [vmem:[%s1037 + $0x10] sm:$0xff]
        %v1041 = vld [vmem:[%s1037 + $0x18] sm:$0xff]
        %v1043 = vsel %vm485, %v1036, 0
        %1045 = vmatprep.subr.mxu0 0.0
        %1046 = vmatpush1.msra.mxu0 %v1038
        %1047 = vmatprep.subr.mxu0 0.0
        %1048 = vmatpush1.msra.mxu0 %v1039
        %1049 = vmatprep.subr.mxu0 0.0
        %1050 = vmatpush1.msra.mxu0 %v1040
        %1051 = vmatprep.subr.mxu0 0.0
        %1052 = vmatpush1.msra.mxu0 %v1041
        %1053 = vmatprep.subr.mxu0 0.0
        %1054 = vmatpush1.msra.mxu0 0.0
        %1055 = vmatprep.subr.mxu0 0.0
        %1056 = vmatpush1.msra.mxu0 0.0
        %1057 = vmatprep.subr.mxu0 0.0
        %1058 = vmatpush1.msra.mxu0 0.0
        %1059 = vmatprep.subr.mxu0 0.0
        %1060 = vmatpush1.msra.mxu0 0.0
        %1061 = vmatprep.subr.mxu0 0.0
        %1062 = vmatpush1.msra.mxu0 0.0
        %1063 = vmatprep.subr.mxu0 0.0
        %1064 = vmatpush1.msra.mxu0 0.0
        %1065 = vmatprep.subr.mxu0 0.0
        %1066 = vmatpush1.msra.mxu0 0.0
        %1067 = vmatprep.subr.mxu0 0.0
        %1068 = vmatpush1.msra.mxu0 0.0
        %1069 = vmatprep.subr.mxu0 0.0
        %1070 = vmatpush1.msra.mxu0 0.0
        %1071 = vmatprep.subr.mxu0 0.0
        %1072 = vmatpush1.msra.mxu0 0.0
        %1073 = vmatprep.subr.mxu0 0.0
        %1074 = vmatpush1.msra.mxu0 0.0
        %1075 = vmatprep.subr.mxu0 0.0
        %1076 = vmatpush1.msra.mxu0 0.0
        %1077 = vmatprep.subr.mxu0 0.0
        %1078 = vmatpush1.msra.mxu0 0.0
        %1079 = vmatprep.subr.mxu0 0.0
        %1080 = vmatpush1.msra.mxu0 0.0
        %1081 = vmatprep.subr.mxu0 0.0
        %1082 = vmatpush1.msra.mxu0 0.0
        %1083 = vmatprep.subr.mxu0 0.0
        %1084 = vmatpush1.msra.mxu0 0.0
        %1085 = vmatprep.subr.mxu0 0.0
        %1086 = vmatpush1.msra.mxu0 0.0
        %1087 = vmatprep.subr.mxu0 0.0
        %1088 = vmatpush1.msra.mxu0 0.0
        %1089 = vmatprep.subr.mxu0 0.0
        %1090 = vmatpush1.msra.mxu0 0.0
        %1091 = vmatprep.subr.mxu0 0.0
        %1092 = vmatpush1.msra.mxu0 0.0
        %1093 = vmatprep.subr.mxu0 0.0
        %1094 = vmatpush1.msra.mxu0 0.0
        %1095 = vmatprep.subr.mxu0 0.0
        %1096 = vmatpush1.msra.mxu0 0.0
        %1097 = vmatprep.subr.mxu0 0.0
        %1098 = vmatpush1.msra.mxu0 0.0
        %1099 = vmatprep.subr.mxu0 0.0
        %1100 = vmatpush1.msra.mxu0 0.0
        %1101 = vmatprep.subr.mxu0 0.0
        %1102 = vmatpush1.msra.mxu0 0.0
        %1103 = vmatprep.subr.mxu0 0.0
        %1104 = vmatpush1.msra.mxu0 0.0
        %1105 = vmatprep.subr.mxu0 0.0
        %1106 = vmatpush1.msra.mxu0 0.0
        %1107 = vmatprep.subr.mxu0 0.0
        %1108 = vmatpush1.msra.mxu0 0.0
        %1109 = vmatprep.mubr.f32.mxu0 0.0
        %1110 = vmatmul.mubr.f32.gmra.mrb[0].mxu0 %v1043
        %v1111 = vpop.f32.mrb[0].mxu0
        %v1112 = vadd.f32 0.0, %v1111
        %v1113 = vpop.f32.mrb[0].mxu0
        %1114 = vdwg.mxu0
        %v1115 = vsel %vm485, %v1112, 0.0
        %1116 = vadd.xlane.f32.xlu0 %v1115
        %v1117 = vpop.xlane.xlu0 %1116
        %v1118 = vmul.f32 %v1117, %v1011
        %v1119 = vsub.f32 %v1112, %v1118
        %v1120 = vmul.f32 %v1119, %v1119
        %v1121 = vsel %vm485, %v1120, 0.0
        %1122 = vadd.xlane.f32.xlu0 %v1121
        %v1123 = vpop.xlane.xlu0 %1122
        %v1124 = vmul.f32 %v1123, %v1011
        %v1125 = vadd.f32 %v1124, 1e-05
        %v1126 = vrsqrt.pop %v1125
        %v1127 = vmul.f32 %v1119, %v1126
        %v1128 = vlaneseq
        %v1129 = vshrl.u32 %v1128, 7
        %v1130 = vsub.s32 2, %v1129
        %v1131 = vrot.slane %v1007, %v1130
        %v1132 = vmul.f32 %v1127, %v1131
        %v1133 = vlaneseq
        %v1134 = vshrl.u32 %v1133, 7
        %v1135 = vsub.s32 3, %v1134
        %v1136 = vrot.slane %v1007, %v1135
        %v1137 = vadd.f32 %v1132, %v1136
        %v1138 = vadd.f32 %v462, %v1137
        %s1139 = scalar_lea.vmem %s3, 32
        %v1140 = vld [vmem:[%s1139] sm:$0xff]
        %v1141 = vld [vmem:[%s1139 + $0x8] sm:$0xff]
        %v1142 = vld [vmem:[%s1139 + $0x10] sm:$0xff]
        %v1143 = vld [vmem:[%s1139 + $0x18] sm:$0xff]
        %v1145 = vsel %vm485, %v1138, 0
        %1147 = vmatprep.subr.mxu0 0.0
        %1148 = vmatpush1.msra.mxu0 %v1140
        %1149 = vmatprep.subr.mxu0 0.0
        %1150 = vmatpush1.msra.mxu0 %v1141
        %1151 = vmatprep.subr.mxu0 0.0
        %1152 = vmatpush1.msra.mxu0 %v1142
        %1153 = vmatprep.subr.mxu0 0.0
        %1154 = vmatpush1.msra.mxu0 %v1143
        %1155 = vmatprep.subr.mxu0 0.0
        %1156 = vmatpush1.msra.mxu0 0.0
        %1157 = vmatprep.subr.mxu0 0.0
        %1158 = vmatpush1.msra.mxu0 0.0
        %1159 = vmatprep.subr.mxu0 0.0
        %1160 = vmatpush1.msra.mxu0 0.0
        %1161 = vmatprep.subr.mxu0 0.0
        %1162 = vmatpush1.msra.mxu0 0.0
        %1163 = vmatprep.subr.mxu0 0.0
        %1164 = vmatpush1.msra.mxu0 0.0
        %1165 = vmatprep.subr.mxu0 0.0
        %1166 = vmatpush1.msra.mxu0 0.0
        %1167 = vmatprep.subr.mxu0 0.0
        %1168 = vmatpush1.msra.mxu0 0.0
        %1169 = vmatprep.subr.mxu0 0.0
        %1170 = vmatpush1.msra.mxu0 0.0
        %1171 = vmatprep.subr.mxu0 0.0
        %1172 = vmatpush1.msra.mxu0 0.0
        %1173 = vmatprep.subr.mxu0 0.0
        %1174 = vmatpush1.msra.mxu0 0.0
        %1175 = vmatprep.subr.mxu0 0.0
        %1176 = vmatpush1.msra.mxu0 0.0
        %1177 = vmatprep.subr.mxu0 0.0
        %1178 = vmatpush1.msra.mxu0 0.0
        %1179 = vmatprep.subr.mxu0 0.0
        %1180 = vmatpush1.msra.mxu0 0.0
        %1181 = vmatprep.subr.mxu0 0.0
        %1182 = vmatpush1.msra.mxu0 0.0
        %1183 = vmatprep.subr.mxu0 0.0
        %1184 = vmatpush1.msra.mxu0 0.0
        %1185 = vmatprep.subr.mxu0 0.0
        %1186 = vmatpush1.msra.mxu0 0.0
        %1187 = vmatprep.subr.mxu0 0.0
        %1188 = vmatpush1.msra.mxu0 0.0
        %1189 = vmatprep.subr.mxu0 0.0
        %1190 = vmatpush1.msra.mxu0 0.0
        %1191 = vmatprep.subr.mxu0 0.0
        %1192 = vmatpush1.msra.mxu0 0.0
        %1193 = vmatprep.subr.mxu0 0.0
        %1194 = vmatpush1.msra.mxu0 0.0
        %1195 = vmatprep.subr.mxu0 0.0
        %1196 = vmatpush1.msra.mxu0 0.0
        %1197 = vmatprep.subr.mxu0 0.0
        %1198 = vmatpush1.msra.mxu0 0.0
        %1199 = vmatprep.subr.mxu0 0.0
        %1200 = vmatpush1.msra.mxu0 0.0
        %1201 = vmatprep.subr.mxu0 0.0
        %1202 = vmatpush1.msra.mxu0 0.0
        %1203 = vmatprep.subr.mxu0 0.0
        %1204 = vmatpush1.msra.mxu0 0.0
        %1205 = vmatprep.subr.mxu0 0.0
        %1206 = vmatpush1.msra.mxu0 0.0
        %1207 = vmatprep.subr.mxu0 0.0
        %1208 = vmatpush1.msra.mxu0 0.0
        %1209 = vmatprep.subr.mxu0 0.0
        %1210 = vmatpush1.msra.mxu0 0.0
        %1211 = vmatprep.mubr.f32.mxu0 0.0
        %1212 = vmatmul.mubr.f32.gmra.mrb[0].mxu0 %v1145
        %v1213 = vpop.f32.mrb[0].mxu0
        %v1214 = vadd.f32 0.0, %v1213
        %v1215 = vpop.f32.mrb[0].mxu0
        %1216 = vdwg.mxu0
        %v1217 = vmul.f32 %v1214, %v568
        %v1218 = vmul.f32 %v1214, %v570
        %v1219 = vmul.f32 %v1214, %v572
        %v1220 = vmul.f32 %v1214, %v574
        %v1221 = vmul.f32 %v1214, %v576
        %v1222 = vmul.f32 %v1214, %v578
        %v1223 = vmul.f32 %v1214, %v580
        %v1224 = vmul.f32 %v1214, %v582
        %v1225 = vmul.f32 %v1214, %v600
        %v1226 = vmul.f32 %v1214, %v602
        %v1227 = vmul.f32 %v1214, %v604
        %v1228 = vmul.f32 %v1214, %v606
        %v1229 = vmul.f32 %v1214, %v608
        %v1230 = vmul.f32 %v1214, %v610
        %v1231 = vmul.f32 %v1214, %v612
        %v1232 = vmul.f32 %v1214, %v614
        %1241 = vrot.lane.b32.xlu0 %v1217, 96
        %v1242 = vpop.permute.xlu0 %1241
        %1243 = vrot.lane.b32.xlu0 %v1218, 96
        %v1244 = vpop.permute.xlu0 %1243
        %1245 = vrot.lane.b32.xlu0 %v1219, 96
        %v1246 = vpop.permute.xlu0 %1245
        %1247 = vrot.lane.b32.xlu0 %v1220, 96
        %v1248 = vpop.permute.xlu0 %1247
        %1249 = vrot.lane.b32.xlu0 %v1221, 96
        %v1250 = vpop.permute.xlu0 %1249
        %1251 = vrot.lane.b32.xlu0 %v1222, 96
        %v1252 = vpop.permute.xlu0 %1251
        %1253 = vrot.lane.b32.xlu0 %v1223, 96
        %v1254 = vpop.permute.xlu0 %1253
        %1255 = vrot.lane.b32.xlu0 %v1224, 96
        %v1256 = vpop.permute.xlu0 %1255
        %v1258 = vsel %vm485, %v1214, 0
        %v1260 = vsel %vm485, %v1242, 0
        %v1262 = vsel %vm485, %v1244, 0
        %v1264 = vsel %vm485, %v1246, 0
        %v1266 = vsel %vm485, %v1248, 0
        %v1268 = vsel %vm485, %v1250, 0
        %v1270 = vsel %vm485, %v1252, 0
        %v1272 = vsel %vm485, %v1254, 0
        %v1274 = vsel %vm485, %v1256, 0
        %1276 = vmatprep.subr.mxu0 0.0
        %1277 = vmatpush1.xpose.msra.mxu0 %v1260
        %1278 = vmatprep.subr.mxu0 0.0
        %1279 = vmatpush1.xpose.msra.mxu0 %v1262
        %1280 = vmatprep.subr.mxu0 0.0
        %1281 = vmatpush1.xpose.msra.mxu0 %v1264
        %1282 = vmatprep.subr.mxu0 0.0
        %1283 = vmatpush1.xpose.msra.mxu0 %v1266
        %1284 = vmatprep.subr.mxu0 0.0
        %1285 = vmatpush1.xpose.msra.mxu0 %v1268
        %1286 = vmatprep.subr.mxu0 0.0
        %1287 = vmatpush1.xpose.msra.mxu0 %v1270
        %1288 = vmatprep.subr.mxu0 0.0
        %1289 = vmatpush1.xpose.msra.mxu0 %v1272
        %1290 = vmatprep.subr.mxu0 0.0
        %1291 = vmatpush1.xpose.msra.mxu0 %v1274
        %1292 = vmatprep.subr.mxu0 0.0
        %1293 = vmatpush1.xpose.msra.mxu0 0.0
        %1294 = vmatprep.subr.mxu0 0.0
        %1295 = vmatpush1.xpose.msra.mxu0 0.0
        %1296 = vmatprep.subr.mxu0 0.0
        %1297 = vmatpush1.xpose.msra.mxu0 0.0
        %1298 = vmatprep.subr.mxu0 0.0
        %1299 = vmatpush1.xpose.msra.mxu0 0.0
        %1300 = vmatprep.subr.mxu0 0.0
        %1301 = vmatpush1.xpose.msra.mxu0 0.0
        %1302 = vmatprep.subr.mxu0 0.0
        %1303 = vmatpush1.xpose.msra.mxu0 0.0
        %1304 = vmatprep.subr.mxu0 0.0
        %1305 = vmatpush1.xpose.msra.mxu0 0.0
        %1306 = vmatprep.subr.mxu0 0.0
        %1307 = vmatpush1.xpose.msra.mxu0 0.0
        %1308 = vmatprep.subr.mxu0 0.0
        %1309 = vmatpush1.xpose.msra.mxu0 0.0
        %1310 = vmatprep.subr.mxu0 0.0
        %1311 = vmatpush1.xpose.msra.mxu0 0.0
        %1312 = vmatprep.subr.mxu0 0.0
        %1313 = vmatpush1.xpose.msra.mxu0 0.0
        %1314 = vmatprep.subr.mxu0 0.0
        %1315 = vmatpush1.xpose.msra.mxu0 0.0
        %1316 = vmatprep.subr.mxu0 0.0
        %1317 = vmatpush1.xpose.msra.mxu0 0.0
        %1318 = vmatprep.subr.mxu0 0.0
        %1319 = vmatpush1.xpose.msra.mxu0 0.0
        %1320 = vmatprep.subr.mxu0 0.0
        %1321 = vmatpush1.xpose.msra.mxu0 0.0
        %1322 = vmatprep.subr.mxu0 0.0
        %1323 = vmatpush1.xpose.msra.mxu0 0.0
        %1324 = vmatprep.subr.mxu0 0.0
        %1325 = vmatpush1.xpose.msra.mxu0 0.0
        %1326 = vmatprep.subr.mxu0 0.0
        %1327 = vmatpush1.xpose.msra.mxu0 0.0
        %1328 = vmatprep.subr.mxu0 0.0
        %1329 = vmatpush1.xpose.msra.mxu0 0.0
        %1330 = vmatprep.subr.mxu0 0.0
        %1331 = vmatpush1.xpose.msra.mxu0 0.0
        %1332 = vmatprep.subr.mxu0 0.0
        %1333 = vmatpush1.xpose.msra.mxu0 0.0
        %1334 = vmatprep.subr.mxu0 0.0
        %1335 = vmatpush1.xpose.msra.mxu0 0.0
        %1336 = vmatprep.subr.mxu0 0.0
        %1337 = vmatpush1.xpose.msra.mxu0 0.0
        %1338 = vmatprep.subr.mxu0 0.0
        %1339 = vmatpush1.xpose.msra.mxu0 0.0
        %1340 = vmatprep.mubr.f32.mxu0 0.0
        %1341 = vmatmul.mubr.f32.gmra.mrb[0].mxu0 %v1258
        %v1342 = vpop.f32.mrb[0].mxu0
        %v1343 = vadd.f32 0.0, %v1342
        %v1344 = vpop.f32.mrb[0].mxu0
        %1345 = vdwg.mxu0
        %v1346 = vsel %vm391, %v1343, -inf
        %1347 = vmax.xlane.f32.xlu0 %v1346
        %v1348 = vpop.xlane.xlu0 %1347
        %v1349 = vsub.f32 %v1343, %v1348
        %v1350 = vmul.f32 %v1349, 1.442695
        %v1351 = vpow.pop %v1350
        %v1353 = vsel %vm391, %v1351, 0
        %1355 = vmatprep.subr.mxu0 0.0
        %1356 = vmatpush1.msra.mxu0 %v473
        %1357 = vmatprep.subr.mxu0 0.0
        %1358 = vmatpush1.msra.mxu0 %v474
        %1359 = vmatprep.subr.mxu0 0.0
        %1360 = vmatpush1.msra.mxu0 %v475
        %1361 = vmatprep.subr.mxu0 0.0
        %1362 = vmatpush1.msra.mxu0 %v476
        %1363 = vmatprep.subr.mxu0 0.0
        %1364 = vmatpush1.msra.mxu0 %v477
        %1365 = vmatprep.subr.mxu0 0.0
        %1366 = vmatpush1.msra.mxu0 %v478
        %1367 = vmatprep.subr.mxu0 0.0
        %1368 = vmatpush1.msra.mxu0 %v479
        %1369 = vmatprep.subr.mxu0 0.0
        %1370 = vmatpush1.msra.mxu0 %v480
        %1371 = vmatprep.subr.mxu0 0.0
        %1372 = vmatpush1.msra.mxu0 0.0
        %1373 = vmatprep.subr.mxu0 0.0
        %1374 = vmatpush1.msra.mxu0 0.0
        %1375 = vmatprep.subr.mxu0 0.0
        %1376 = vmatpush1.msra.mxu0 0.0
        %1377 = vmatprep.subr.mxu0 0.0
        %1378 = vmatpush1.msra.mxu0 0.0
        %1379 = vmatprep.subr.mxu0 0.0
        %1380 = vmatpush1.msra.mxu0 0.0
        %1381 = vmatprep.subr.mxu0 0.0
        %1382 = vmatpush1.msra.mxu0 0.0
        %1383 = vmatprep.subr.mxu0 0.0
        %1384 = vmatpush1.msra.mxu0 0.0
        %1385 = vmatprep.subr.mxu0 0.0
        %1386 = vmatpush1.msra.mxu0 0.0
        %1387 = vmatprep.subr.mxu0 0.0
        %1388 = vmatpush1.msra.mxu0 0.0
        %1389 = vmatprep.subr.mxu0 0.0
        %1390 = vmatpush1.msra.mxu0 0.0
        %1391 = vmatprep.subr.mxu0 0.0
        %1392 = vmatpush1.msra.mxu0 0.0
        %1393 = vmatprep.subr.mxu0 0.0
        %1394 = vmatpush1.msra.mxu0 0.0
        %1395 = vmatprep.subr.mxu0 0.0
        %1396 = vmatpush1.msra.mxu0 0.0
        %1397 = vmatprep.subr.mxu0 0.0
        %1398 = vmatpush1.msra.mxu0 0.0
        %1399 = vmatprep.subr.mxu0 0.0
        %1400 = vmatpush1.msra.mxu0 0.0
        %1401 = vmatprep.subr.mxu0 0.0
        %1402 = vmatpush1.msra.mxu0 0.0
        %1403 = vmatprep.subr.mxu0 0.0
        %1404 = vmatpush1.msra.mxu0 0.0
        %1405 = vmatprep.subr.mxu0 0.0
        %1406 = vmatpush1.msra.mxu0 0.0
        %1407 = vmatprep.subr.mxu0 0.0
        %1408 = vmatpush1.msra.mxu0 0.0
        %1409 = vmatprep.subr.mxu0 0.0
        %1410 = vmatpush1.msra.mxu0 0.0
        %1411 = vmatprep.subr.mxu0 0.0
        %1412 = vmatpush1.msra.mxu0 0.0
        %1413 = vmatprep.subr.mxu0 0.0
        %1414 = vmatpush1.msra.mxu0 0.0
        %1415 = vmatprep.subr.mxu0 0.0
        %1416 = vmatpush1.msra.mxu0 0.0
        %1417 = vmatprep.subr.mxu0 0.0
        %1418 = vmatpush1.msra.mxu0 0.0
        %1419 = vmatprep.mubr.f32.mxu0 0.0
        %1420 = vmatmul.mubr.f32.gmra.mrb[0].mxu0 %v1353
        %v1421 = vpop.f32.mrb[0].mxu0
        %v1422 = vadd.f32 0.0, %v1421
        %v1423 = vpop.f32.mrb[0].mxu0
        %1424 = vdwg.mxu0
        %v1425 = vrcp.pop %v1422
        %v1426 = vmul.f32 %v1351, %v1425
        %1435 = vrot.lane.b32.xlu0 %v1225, 64
        %v1436 = vpop.permute.xlu0 %1435
        %1437 = vrot.lane.b32.xlu0 %v1226, 64
        %v1438 = vpop.permute.xlu0 %1437
        %1439 = vrot.lane.b32.xlu0 %v1227, 64
        %v1440 = vpop.permute.xlu0 %1439
        %1441 = vrot.lane.b32.xlu0 %v1228, 64
        %v1442 = vpop.permute.xlu0 %1441
        %1443 = vrot.lane.b32.xlu0 %v1229, 64
        %v1444 = vpop.permute.xlu0 %1443
        %1445 = vrot.lane.b32.xlu0 %v1230, 64
        %v1446 = vpop.permute.xlu0 %1445
        %1447 = vrot.lane.b32.xlu0 %v1231, 64
        %v1448 = vpop.permute.xlu0 %1447
        %1449 = vrot.lane.b32.xlu0 %v1232, 64
        %v1450 = vpop.permute.xlu0 %1449
        %v1460 = vsel %vm391, %v1426, 0
        %1462 = vmatprep.subr.mxu0 0.0
        %1463 = vmatpush1.msra.mxu0 %v1436
        %1464 = vmatprep.subr.mxu0 0.0
        %1465 = vmatpush1.msra.mxu0 %v1438
        %1466 = vmatprep.subr.mxu0 0.0
        %1467 = vmatpush1.msra.mxu0 %v1440
        %1468 = vmatprep.subr.mxu0 0.0
        %1469 = vmatpush1.msra.mxu0 %v1442
        %1470 = vmatprep.subr.mxu0 0.0
        %1471 = vmatpush1.msra.mxu0 %v1444
        %1472 = vmatprep.subr.mxu0 0.0
        %1473 = vmatpush1.msra.mxu0 %v1446
        %1474 = vmatprep.subr.mxu0 0.0
        %1475 = vmatpush1.msra.mxu0 %v1448
        %1476 = vmatprep.subr.mxu0 0.0
        %1477 = vmatpush1.msra.mxu0 %v1450
        %1478 = vmatprep.subr.mxu0 0.0
        %1479 = vmatpush1.msra.mxu0 0.0
        %1480 = vmatprep.subr.mxu0 0.0
        %1481 = vmatpush1.msra.mxu0 0.0
        %1482 = vmatprep.subr.mxu0 0.0
        %1483 = vmatpush1.msra.mxu0 0.0
        %1484 = vmatprep.subr.mxu0 0.0
        %1485 = vmatpush1.msra.mxu0 0.0
        %1486 = vmatprep.subr.mxu0 0.0
        %1487 = vmatpush1.msra.mxu0 0.0
        %1488 = vmatprep.subr.mxu0 0.0
        %1489 = vmatpush1.msra.mxu0 0.0
        %1490 = vmatprep.subr.mxu0 0.0
        %1491 = vmatpush1.msra.mxu0 0.0
        %1492 = vmatprep.subr.mxu0 0.0
        %1493 = vmatpush1.msra.mxu0 0.0
        %1494 = vmatprep.subr.mxu0 0.0
        %1495 = vmatpush1.msra.mxu0 0.0
        %1496 = vmatprep.subr.mxu0 0.0
        %1497 = vmatpush1.msra.mxu0 0.0
        %1498 = vmatprep.subr.mxu0 0.0
        %1499 = vmatpush1.msra.mxu0 0.0
        %1500 = vmatprep.subr.mxu0 0.0
        %1501 = vmatpush1.msra.mxu0 0.0
        %1502 = vmatprep.subr.mxu0 0.0
        %1503 = vmatpush1.msra.mxu0 0.0
        %1504 = vmatprep.subr.mxu0 0.0
        %1505 = vmatpush1.msra.mxu0 0.0
        %1506 = vmatprep.subr.mxu0 0.0
        %1507 = vmatpush1.msra.mxu0 0.0
        %1508 = vmatprep.subr.mxu0 0.0
        %1509 = vmatpush1.msra.mxu0 0.0
        %1510 = vmatprep.subr.mxu0 0.0
        %1511 = vmatpush1.msra.mxu0 0.0
        %1512 = vmatprep.subr.mxu0 0.0
        %1513 = vmatpush1.msra.mxu0 0.0
        %1514 = vmatprep.subr.mxu0 0.0
        %1515 = vmatpush1.msra.mxu0 0.0
        %1516 = vmatprep.subr.mxu0 0.0
        %1517 = vmatpush1.msra.mxu0 0.0
        %1518 = vmatprep.subr.mxu0 0.0
        %1519 = vmatpush1.msra.mxu0 0.0
        %1520 = vmatprep.subr.mxu0 0.0
        %1521 = vmatpush1.msra.mxu0 0.0
        %1522 = vmatprep.subr.mxu0 0.0
        %1523 = vmatpush1.msra.mxu0 0.0
        %1524 = vmatprep.subr.mxu0 0.0
        %1525 = vmatpush1.msra.mxu0 0.0
        %1526 = vmatprep.mubr.f32.mxu0 0.0
        %1527 = vmatmul.mubr.f32.gmra.mrb[0].mxu0 %v1460
        %v1528 = vpop.f32.mrb[0].mxu0
        %v1529 = vadd.f32 0.0, %v1528
        %v1530 = vpop.f32.mrb[0].mxu0
        %1531 = vdwg.mxu0
        %s1532 = scalar_lea.vmem %s4, 64
        %v1533 = vld [vmem:[%s1532] sm:$0xff]
        %v1534 = vld [vmem:[%s1532 + $0x8] sm:$0xff]
        %v1535 = vld [vmem:[%s1532 + $0x10] sm:$0xff]
        %v1536 = vld [vmem:[%s1532 + $0x18] sm:$0xff]
        %v1538 = vsel %vm485, %v1529, 0
        %1540 = vmatprep.subr.mxu0 0.0
        %1541 = vmatpush1.msra.mxu0 %v1533
        %1542 = vmatprep.subr.mxu0 0.0
        %1543 = vmatpush1.msra.mxu0 %v1534
        %1544 = vmatprep.subr.mxu0 0.0
        %1545 = vmatpush1.msra.mxu0 %v1535
        %1546 = vmatprep.subr.mxu0 0.0
        %1547 = vmatpush1.msra.mxu0 %v1536
        %1548 = vmatprep.subr.mxu0 0.0
        %1549 = vmatpush1.msra.mxu0 0.0
        %1550 = vmatprep.subr.mxu0 0.0
        %1551 = vmatpush1.msra.mxu0 0.0
        %1552 = vmatprep.subr.mxu0 0.0
        %1553 = vmatpush1.msra.mxu0 0.0
        %1554 = vmatprep.subr.mxu0 0.0
        %1555 = vmatpush1.msra.mxu0 0.0
        %1556 = vmatprep.subr.mxu0 0.0
        %1557 = vmatpush1.msra.mxu0 0.0
        %1558 = vmatprep.subr.mxu0 0.0
        %1559 = vmatpush1.msra.mxu0 0.0
        %1560 = vmatprep.subr.mxu0 0.0
        %1561 = vmatpush1.msra.mxu0 0.0
        %1562 = vmatprep.subr.mxu0 0.0
        %1563 = vmatpush1.msra.mxu0 0.0
        %1564 = vmatprep.subr.mxu0 0.0
        %1565 = vmatpush1.msra.mxu0 0.0
        %1566 = vmatprep.subr.mxu0 0.0
        %1567 = vmatpush1.msra.mxu0 0.0
        %1568 = vmatprep.subr.mxu0 0.0
        %1569 = vmatpush1.msra.mxu0 0.0
        %1570 = vmatprep.subr.mxu0 0.0
        %1571 = vmatpush1.msra.mxu0 0.0
        %1572 = vmatprep.subr.mxu0 0.0
        %1573 = vmatpush1.msra.mxu0 0.0
        %1574 = vmatprep.subr.mxu0 0.0
        %1575 = vmatpush1.msra.mxu0 0.0
        %1576 = vmatprep.subr.mxu0 0.0
        %1577 = vmatpush1.msra.mxu0 0.0
        %1578 = vmatprep.subr.mxu0 0.0
        %1579 = vmatpush1.msra.mxu0 0.0
        %1580 = vmatprep.subr.mxu0 0.0
        %1581 = vmatpush1.msra.mxu0 0.0
        %1582 = vmatprep.subr.mxu0 0.0
        %1583 = vmatpush1.msra.mxu0 0.0
        %1584 = vmatprep.subr.mxu0 0.0
        %1585 = vmatpush1.msra.mxu0 0.0
        %1586 = vmatprep.subr.mxu0 0.0
        %1587 = vmatpush1.msra.mxu0 0.0
        %1588 = vmatprep.subr.mxu0 0.0
        %1589 = vmatpush1.msra.mxu0 0.0
        %1590 = vmatprep.subr.mxu0 0.0
        %1591 = vmatpush1.msra.mxu0 0.0
        %1592 = vmatprep.subr.mxu0 0.0
        %1593 = vmatpush1.msra.mxu0 0.0
        %1594 = vmatprep.subr.mxu0 0.0
        %1595 = vmatpush1.msra.mxu0 0.0
        %1596 = vmatprep.subr.mxu0 0.0
        %1597 = vmatpush1.msra.mxu0 0.0
        %1598 = vmatprep.subr.mxu0 0.0
        %1599 = vmatpush1.msra.mxu0 0.0
        %1600 = vmatprep.subr.mxu0 0.0
        %1601 = vmatpush1.msra.mxu0 0.0
        %1602 = vmatprep.subr.mxu0 0.0
        %1603 = vmatpush1.msra.mxu0 0.0
        %1604 = vmatprep.mubr.f32.mxu0 0.0
        %1605 = vmatmul.mubr.f32.gmra.mrb[0].mxu0 %v1538
        %v1606 = vpop.f32.mrb[0].mxu0
        %v1607 = vadd.f32 0.0, %v1606
        %v1608 = vpop.f32.mrb[0].mxu0
        %1609 = vdwg.mxu0
        %s1610 = scalar_lea.vmem %s5, 4
        %v1611 = vld [vmem:[%s1610] sm:$0xf]
        %v1612 = vsel %vm485, %v1607, 0.0
        %1613 = vadd.xlane.f32.xlu0 %v1612
        %v1614 = vpop.xlane.xlu0 %1613
        %v1615 = vmul.f32 %v1614, %v1011
        %v1616 = vsub.f32 %v1607, %v1615
        %v1617 = vmul.f32 %v1616, %v1616
        %v1618 = vsel %vm485, %v1617, 0.0
        %1619 = vadd.xlane.f32.xlu0 %v1618
        %v1620 = vpop.xlane.xlu0 %1619
        %v1621 = vmul.f32 %v1620, %v1011
        %v1622 = vadd.f32 %v1621, 1e-05
        %v1623 = vrsqrt.pop %v1622
        %v1624 = vmul.f32 %v1616, %v1623
        %v1625 = vlaneseq
        %v1626 = vshrl.u32 %v1625, 7
        %v1627 = vsub.s32 0, %v1626
        %v1628 = vrot.slane %v1611, %v1627
        %v1629 = vmul.f32 %v1624, %v1628
        %v1630 = vlaneseq
        %v1631 = vshrl.u32 %v1630, 7
        %v1632 = vsub.s32 1, %v1631
        %v1633 = vrot.slane %v1611, %v1632
        %v1634 = vadd.f32 %v1629, %v1633
        %s1635 = sld [smem:[#allocation2 + $0x2]]
        %vm1636 = vcmp.ge.f32.partialorder %v1634, 0.0
        %v1637 = vstv %s1635
        %v1638 = vmul.f32 %v1637, %v1634
        %v1639 = vsel %vm1636, %v1634, %v1638
        %s1640 = scalar_lea.vmem %s4, 96
        %v1641 = vld [vmem:[%s1640] sm:$0xff]
        %v1642 = vld [vmem:[%s1640 + $0x8] sm:$0xff]
        %v1643 = vld [vmem:[%s1640 + $0x10] sm:$0xff]
        %v1644 = vld [vmem:[%s1640 + $0x18] sm:$0xff]
        %v1646 = vsel %vm485, %v1639, 0
        %1648 = vmatprep.subr.mxu0 0.0
        %1649 = vmatpush1.msra.mxu0 %v1641
        %1650 = vmatprep.subr.mxu0 0.0
        %1651 = vmatpush1.msra.mxu0 %v1642
        %1652 = vmatprep.subr.mxu0 0.0
        %1653 = vmatpush1.msra.mxu0 %v1643
        %1654 = vmatprep.subr.mxu0 0.0
        %1655 = vmatpush1.msra.mxu0 %v1644
        %1656 = vmatprep.subr.mxu0 0.0
        %1657 = vmatpush1.msra.mxu0 0.0
        %1658 = vmatprep.subr.mxu0 0.0
        %1659 = vmatpush1.msra.mxu0 0.0
        %1660 = vmatprep.subr.mxu0 0.0
        %1661 = vmatpush1.msra.mxu0 0.0
        %1662 = vmatprep.subr.mxu0 0.0
        %1663 = vmatpush1.msra.mxu0 0.0
        %1664 = vmatprep.subr.mxu0 0.0
        %1665 = vmatpush1.msra.mxu0 0.0
        %1666 = vmatprep.subr.mxu0 0.0
        %1667 = vmatpush1.msra.mxu0 0.0
        %1668 = vmatprep.subr.mxu0 0.0
        %1669 = vmatpush1.msra.mxu0 0.0
        %1670 = vmatprep.subr.mxu0 0.0
        %1671 = vmatpush1.msra.mxu0 0.0
        %1672 = vmatprep.subr.mxu0 0.0
        %1673 = vmatpush1.msra.mxu0 0.0
        %1674 = vmatprep.subr.mxu0 0.0
        %1675 = vmatpush1.msra.mxu0 0.0
        %1676 = vmatprep.subr.mxu0 0.0
        %1677 = vmatpush1.msra.mxu0 0.0
        %1678 = vmatprep.subr.mxu0 0.0
        %1679 = vmatpush1.msra.mxu0 0.0
        %1680 = vmatprep.subr.mxu0 0.0
        %1681 = vmatpush1.msra.mxu0 0.0
        %1682 = vmatprep.subr.mxu0 0.0
        %1683 = vmatpush1.msra.mxu0 0.0
        %1684 = vmatprep.subr.mxu0 0.0
        %1685 = vmatpush1.msra.mxu0 0.0
        %1686 = vmatprep.subr.mxu0 0.0
        %1687 = vmatpush1.msra.mxu0 0.0
        %1688 = vmatprep.subr.mxu0 0.0
        %1689 = vmatpush1.msra.mxu0 0.0
        %1690 = vmatprep.subr.mxu0 0.0
        %1691 = vmatpush1.msra.mxu0 0.0
        %1692 = vmatprep.subr.mxu0 0.0
        %1693 = vmatpush1.msra.mxu0 0.0
        %1694 = vmatprep.subr.mxu0 0.0
        %1695 = vmatpush1.msra.mxu0 0.0
        %1696 = vmatprep.subr.mxu0 0.0
        %1697 = vmatpush1.msra.mxu0 0.0
        %1698 = vmatprep.subr.mxu0 0.0
        %1699 = vmatpush1.msra.mxu0 0.0
        %1700 = vmatprep.subr.mxu0 0.0
        %1701 = vmatpush1.msra.mxu0 0.0
        %1702 = vmatprep.subr.mxu0 0.0
        %1703 = vmatpush1.msra.mxu0 0.0
        %1704 = vmatprep.subr.mxu0 0.0
        %1705 = vmatpush1.msra.mxu0 0.0
        %1706 = vmatprep.subr.mxu0 0.0
        %1707 = vmatpush1.msra.mxu0 0.0
        %1708 = vmatprep.subr.mxu0 0.0
        %1709 = vmatpush1.msra.mxu0 0.0
        %1710 = vmatprep.subr.mxu0 0.0
        %1711 = vmatpush1.msra.mxu0 0.0
        %1712 = vmatprep.mubr.f32.mxu0 0.0
        %1713 = vmatmul.mubr.f32.gmra.mrb[0].mxu0 %v1646
        %v1714 = vpop.f32.mrb[0].mxu0
        %v1715 = vadd.f32 0.0, %v1714
        %v1716 = vpop.f32.mrb[0].mxu0
        %1717 = vdwg.mxu0
        %v1718 = vsel %vm485, %v1715, 0.0
        %1719 = vadd.xlane.f32.xlu0 %v1718
        %v1720 = vpop.xlane.xlu0 %1719
        %v1721 = vmul.f32 %v1720, %v1011
        %v1722 = vsub.f32 %v1715, %v1721
        %v1723 = vmul.f32 %v1722, %v1722
        %v1724 = vsel %vm485, %v1723, 0.0
        %1725 = vadd.xlane.f32.xlu0 %v1724
        %v1726 = vpop.xlane.xlu0 %1725
        %v1727 = vmul.f32 %v1726, %v1011
        %v1728 = vadd.f32 %v1727, 1e-05
        %v1729 = vrsqrt.pop %v1728
        %v1730 = vmul.f32 %v1722, %v1729
        %v1731 = vlaneseq
        %v1732 = vshrl.u32 %v1731, 7
        %v1733 = vsub.s32 2, %v1732
        %v1734 = vrot.slane %v1611, %v1733
        %v1735 = vmul.f32 %v1730, %v1734
        %v1736 = vlaneseq
        %v1737 = vshrl.u32 %v1736, 7
        %v1738 = vsub.s32 3, %v1737
        %v1739 = vrot.slane %v1611, %v1738
        %v1740 = vadd.f32 %v1735, %v1739
        %v1741 = vadd.f32 %v1138, %v1740
        %v1742 = vld [vmem:[%s6 + $0x1] sm:$0x1]
        %v1743 = vlaneseq
        %v1744 = vshrl.u32 %v1743, 7
        %v1745 = vsub.s32 0, %v1744
        %v1746 = vrot.slane %v1742, %v1745
        %v1747 = vmul.f32 %v1741, %v1746
        %v1749 = vcombine.high %v1747, %v1747
        %v1751 = vunpack.c.l.s4 1966171168
        %v1752 = vunpack.c.0.s8 %v1751
        %v1753 = vlaneseq
        %v1754 = vshrl.u32 %v1753, 7
        %v1755 = vsub.s32 %v1752, %v1754
        %v1756 = vrot.slane %v1747, %v1755
        %v1758 = vunpack.c.l.s4 1966171168
        %v1759 = vunpack.c.0.s8 %v1758
        %v1760 = vlaneseq
        %v1761 = vshrl.u32 %v1760, 7
        %v1762 = vsub.s32 %v1759, %v1761
        %v1763 = vrot.slane %v1749, %v1762
        %v1764 = vcombine.high %v1756, %v1756
        %v1765 = vcombine.high %v1763, %v1763
        %v1767 = vunpack.c.l.s4 1966171168
        %v1768 = vunpack.c.0.s8 %v1767
        %v1769 = vlaneseq
        %v1770 = vshrl.u32 %v1769, 7
        %v1771 = vsub.s32 %v1768, %v1770
        %v1772 = vrot.slane %v1756, %v1771
        %v1774 = vunpack.c.l.s4 1966171168
        %v1775 = vunpack.c.0.s8 %v1774
        %v1776 = vlaneseq
        %v1777 = vshrl.u32 %v1776, 7
        %v1778 = vsub.s32 %v1775, %v1777
        %v1779 = vrot.slane %v1763, %v1778
        %v1781 = vunpack.c.l.s4 1966171168
        %v1782 = vunpack.c.0.s8 %v1781
        %v1783 = vlaneseq
        %v1784 = vshrl.u32 %v1783, 7
        %v1785 = vsub.s32 %v1782, %v1784
        %v1786 = vrot.slane %v1764, %v1785
        %v1788 = vunpack.c.l.s4 1966171168
        %v1789 = vunpack.c.0.s8 %v1788
        %v1790 = vlaneseq
        %v1791 = vshrl.u32 %v1790, 7
        %v1792 = vsub.s32 %v1789, %v1791
        %v1793 = vrot.slane %v1765, %v1792
        %v1794 = vcombine.high %v1772, %v1772
        %v1795 = vcombine.high %v1779, %v1779
        %v1796 = vcombine.high %v1786, %v1786
        %v1797 = vcombine.high %v1793, %v1793
        %vm1806 = vcmask 253952
        %v1807 = vsel %vm1806, %v1772, 0.0
        %1808 = vadd.xlane.f32.xlu0 %v1807
        %v1809 = vpop.xlane.xlu0 %1808
        %v1810 = vsel %vm1806, %v1786, 0.0
        %1811 = vadd.xlane.f32.xlu0 %v1810
        %v1812 = vpop.xlane.xlu0 %1811
        %v1813 = vsel %vm1806, %v1794, 0.0
        %1814 = vadd.xlane.f32.xlu0 %v1813
        %v1815 = vpop.xlane.xlu0 %1814
        %v1816 = vsel %vm1806, %v1796, 0.0
        %1817 = vadd.xlane.f32.xlu0 %v1816
        %v1818 = vpop.xlane.xlu0 %1817
        %v1819 = vsel %vm1806, %v1779, 0.0
        %1820 = vadd.xlane.f32.xlu0 %v1819
        %v1821 = vpop.xlane.xlu0 %1820
        %v1822 = vsel %vm1806, %v1793, 0.0
        %1823 = vadd.xlane.f32.xlu0 %v1822
        %v1824 = vpop.xlane.xlu0 %1823
        %v1825 = vsel %vm1806, %v1795, 0.0
        %1826 = vadd.xlane.f32.xlu0 %v1825
        %v1827 = vpop.xlane.xlu0 %1826
        %v1828 = vsel %vm1806, %v1797, 0.0
        %1829 = vadd.xlane.f32.xlu0 %v1828
        %v1830 = vpop.xlane.xlu0 %1829
        %s1831 = sld [smem:[#allocation2]]
        %v1832 = vstv %s1831
        %v1833 = vmul.f32 %v1809, %v1832
        %v1834 = vmul.f32 %v1812, %v1832
        %v1835 = vmul.f32 %v1815, %v1832
        %v1836 = vmul.f32 %v1818, %v1832
        %v1837 = vmul.f32 %v1821, %v1832
        %v1838 = vmul.f32 %v1824, %v1832
        %v1839 = vmul.f32 %v1827, %v1832
        %v1840 = vmul.f32 %v1830, %v1832
        %v1849 = vrot.slane %v1834, 7
        %vm1850 = vcmask 1041409
        %v1851 = vsel %vm1850, %v1849, %v1833
        %v1852 = vrot.slane %v1835, 6
        %vm1853 = vcmask 1042434
        %v1854 = vsel %vm1853, %v1852, %v1851
        %v1855 = vrot.slane %v1836, 5
        %vm1856 = vcmask 1043459
        %v1857 = vsel %vm1856, %v1855, %v1854
        %v1858 = vrot.slane %v1837, 4
        %vm1859 = vcmask 1044484
        %v1860 = vsel %vm1859, %v1858, %v1857
        %v1861 = vrot.slane %v1838, 3
        %vm1862 = vcmask 1045509
        %v1863 = vsel %vm1862, %v1861, %v1860
        %v1864 = vrot.slane %v1839, 2
        %vm1865 = vcmask 1046534
        %v1866 = vsel %vm1865, %v1864, %v1863
        %v1867 = vrot.slane %v1840, 1
        %vm1868 = vcmask 1047559
        %v1869 = vsel %vm1868, %v1867, %v1866
        %vm1871 = vcmask 7168
        %1872 = vst.msk [vmem:[%s376] sm:$0xff] %vm1871, %v1869
        %p1873 = scmp.lt.s32.totalorder %s25, 1
        %s1874 = scalar_select %p1873, %s25, 1
        %s1875 = smul.addr %s1874, 8
        %s1876 = scalar_lea.vmem %s9, %s1875
        // Predicated region
        $region69: #{tpu_custom_call.1} parent=55 // pred_check
          %p1877 = pneg %p237
        $region70: #{tpu_custom_call.1} parent=55 // pred_check_branch
          %1879 = sbr.rel (%p1877) target = $region72
        $region71: #{tpu_custom_call.1} parent=55 // pred_region
          _
        $region72: #{tpu_custom_call.1} parent=55 // pred_fallthru
          _
      $region56: #{tpu_custom_call.1} parent=5 // pred_fallthru
        _
      %p1880 = scmp.le.s32.totalorder 2, %s20
      // Predicated region
      $region73: #{tpu_custom_call.1} parent=5 // pred_check
        %p1881 = pneg %p1880
      $region74: #{tpu_custom_call.1} parent=5 // pred_check_branch
        %1883 = sbr.rel (%p1881) target = $region76
      $region75: #{tpu_custom_call.1} parent=5 // pred_region
        %s1884 = ssub.s32 %s20, 2
        // Predicated region
        $region77: #{tpu_custom_call.1} parent=75 // pred_check
          %p1885 = pneg %p243
        $region78: #{tpu_custom_call.1} parent=75 // pred_check_branch
          %1887 = sbr.rel (%p1885) target = $region80
        $region79: #{tpu_custom_call.1} parent=75 // pred_region
          %p1888 = scmp.lt.s32.totalorder %s26, 1
          %s1889 = scalar_select %p1888, %s26, 1
          %s1890 = smul.addr %s1889, 8
          %s1891 = scalar_lea.vmem %s9, %s1890
        $region80: #{tpu_custom_call.1} parent=75 // pred_fallthru
          _
      $region76: #{tpu_custom_call.1} parent=5 // pred_fallthru
        _
    $region6: #{tpu_custom_call.1} parent=1 // loop_footer
      %s24 = sadd.s32 1, %s20
    $region7: #{tpu_custom_call.1} parent=1 // loop_footer_branch
      %19 = sbr.rel target = $region3
    $region8: #{tpu_custom_call.1} parent=1 // loop_exit
      _
    %1892 = vsyncpa [#allocation3], 1
    %s1893 = scalar_lea.sflag [#allocation3], 1
    %1894 = vsyncpa %s1893, 1
    %1895 = vsyncpa [#allocation7], 1
    %1896 = vsyncpa [#allocation4], 1
    %s1897 = scalar_lea.sflag [#allocation4], 1
    %1898 = vsyncpa %s1897, 1

</llo_original>
